<compile_context>
chip_gen: v5e
topology: v5e:2x2
jax: 0.10.0
libtpu: 0.0.40
codegen_flags: <defaults>
</compile_context>

<pallas_src>
import jax
import jax.numpy as jnp
from jax.experimental import pallas as pl
from jax.experimental.pallas import tpu as pltpu

KSIZE = 7
PAD = 3  # kernel_size=7 -> padding=3


def _round_up(n, m):
    return -(-n // m) * m


def _vmem_limit_bytes():
    """Per-generation VMEM budget: ~75% of physical, capped at 96 MiB
    (v5e/v6e: 128 MiB physical -> 96 MiB; v7x: 64 MiB physical -> 48 MiB)."""
    cap = None
    try:
        cap = getattr(pltpu.get_tpu_info(), "vmem_capacity_bytes", None)
    except Exception:
        cap = None
    if not cap:
        cap = 64 * 1024 * 1024  # conservative (v7x-sized) fallback
    return int(min(cap * 3 // 4, 96 * 1024 * 1024))


def _pick_c_tile(C, H, W, itemsize, vmem_budget):
    """Largest divisor of C whose (up to triple-buffered) input block plus the
    resident scratch stays inside the VMEM budget."""
    hp, wp = _round_up(H, 8), _round_up(W, 128)
    per_chan = hp * wp * itemsize                      # one channel, one buffer
    fixed = (2 * hp * wp * 4                           # sum/max accumulators
             + 2 * _round_up(H + 2 * PAD, 8) * _round_up(W + 2 * PAD, 128) * 4
             + 2 * hp * wp * itemsize)                 # double-buffered output
    budget = max(vmem_budget - fixed, per_chan)
    best = 1
    for d in range(1, C + 1):
        if C % d == 0 and 3 * d * per_chan <= budget:
            best = d
    return best


def _buffered_supported():
    """pipeline_mode=pl.Buffered(k) is a newer BlockSpec kwarg; probe for it."""
    try:
        pl.BlockSpec((8, 128), lambda i: (i, 0), pipeline_mode=pl.Buffered(3))
        return True
    except Exception:
        return False


def _make_kernel(H, W):
    K = KSIZE

    def kernel(w_ref, x_ref, o_ref, sum_ref, max_ref, pad_ref):
        # w_ref  : SMEM (2*7*7,) f32   -- [w_avg / C | w_max] flattened weights
        # x_ref  : VMEM (c_tile, H, W) -- one channel slab of one image
        # o_ref  : VMEM (1, H, W)      -- attention map for this image
        # sum_ref, max_ref : VMEM (H, W) f32 resident accumulators
        # pad_ref: VMEM (2, H+6, W+6) f32 zero-padded conv staging buffer
        c_idx = pl.program_id(1)
        n_c = pl.num_programs(1)

        @pl.when(c_idx == 0)
        def _init():
            sum_ref[...] = jnp.zeros_like(sum_ref)
            max_ref[...] = jnp.full(max_ref.shape, -jnp.inf, jnp.float32)

        # Streaming channel reduction.  The channel axis is the *major* axis
        # of the block, so this is purely element-wise VPU work (no XLU).
        xf = x_ref[...].astype(jnp.float32)            # (c_tile, H, W)
        sum_ref[...] += jnp.sum(xf, axis=0)
        max_ref[...] = jnp.maximum(max_ref[...], jnp.max(xf, axis=0))

        @pl.when(c_idx == n_c - 1)
        def _finalize():
            # Zero-padded staging: the padding supplies the conv's zero border,
            # so no boundary masks and no rolls are needed anywhere.
            pad_ref[...] = jnp.zeros_like(pad_ref)
            pad_ref[0, PAD:PAD + H, PAD:PAD + W] = sum_ref[...]  # 1/C in weights
            pad_ref[1, PAD:PAD + H, PAD:PAD + W] = max_ref[...]

            # 7x7 conv, 2 in-channels -> 1 out-channel, no bias.  Each tap is a
            # statically-offset (H, W) window load + scalar FMA; 4 partial
            # accumulators expose ILP.
            accs = [jnp.zeros((H, W), jnp.float32) for _ in range(4)]
            for dy in range(K):
                for dx in range(K):
                    par = (dy * K + dx) & 1
                    wa = w_ref[dy * K + dx]
                    wm = w_ref[K * K + dy * K + dx]
                    accs[par] = accs[par] + wa * pad_ref[0, dy:dy + H, dx:dx + W]
                    accs[2 + par] = accs[2 + par] + wm * pad_ref[1, dy:dy + H, dx:dx + W]
            y = (accs[0] + accs[1]) + (accs[2] + accs[3])
            o_ref[0] = jax.nn.sigmoid(y).astype(o_ref.dtype)

    return kernel


def spatial_attention(x, weight, *, c_tile=None):
    """x: (B, C, H, W); weight: (1, 2, 7, 7) conv weight (no bias)."""
    B, C, H, W = x.shape
    assert weight.shape == (1, 2, KSIZE, KSIZE)

    # Fold the 1/C mean scale into the avg-channel weights (conv is linear).
    w_avg = (weight[0, 0].astype(jnp.float32) / jnp.float32(C)).reshape(-1)
    w_max = weight[0, 1].astype(jnp.float32).reshape(-1)
    w_flat = jnp.concatenate([w_avg, w_max])            # (98,)

    vmem_limit = _vmem_limit_bytes()
    if c_tile is None:
        c_tile = _pick_c_tile(C, H, W, jnp.dtype(x.dtype).itemsize, vmem_limit)
    assert C % c_tile == 0
    n_c = C // c_tile

    # Triple-buffer the streamed x slabs so the compute-only finalize burst of
    # image b overlaps the first DMAs of image b+1 (only useful when n_c > 1).
    x_spec_kwargs = {}
    if n_c >= 2 and _buffered_supported():
        x_spec_kwargs["pipeline_mode"] = pl.Buffered(3)
    x_spec = pl.BlockSpec((None, c_tile, H, W), lambda b, c: (b, c, 0, 0),
                          **x_spec_kwargs)

    kernel = _make_kernel(H, W)

    out = pl.pallas_call(
        kernel,
        out_shape=jax.ShapeDtypeStruct((B, 1, H, W), x.dtype),
        grid_spec=pltpu.PrefetchScalarGridSpec(
            num_scalar_prefetch=0,
            grid=(B, n_c),                              # reduction (C) axis last
            in_specs=[
                pl.BlockSpec(memory_space=pltpu.MemorySpace.SMEM),   # weights
                x_spec,                                              # x slab
            ],
            out_specs=pl.BlockSpec((None, 1, H, W), lambda b, c: (b, 0, 0, 0)),
            scratch_shapes=[
                pltpu.VMEM((H, W), jnp.float32),                     # channel sum
                pltpu.VMEM((H, W), jnp.float32),                     # running max
                pltpu.VMEM((2, H + 2 * PAD, W + 2 * PAD), jnp.float32),  # conv pad
            ],
        ),
        compiler_params=pltpu.CompilerParams(
            dimension_semantics=("parallel", "arbitrary"),
            vmem_limit_bytes=vmem_limit,
        ),
    )(w_flat, x)

    return out


def spatial_attention_ref(x, weight):
    """Pure-JAX reference mirroring the PyTorch forward."""
    xf = x.astype(jnp.float32)
    avg = jnp.mean(xf, axis=1, keepdims=True)
    mx = jnp.max(xf, axis=1, keepdims=True)
    cat = jnp.concatenate([avg, mx], axis=1)            # (B, 2, H, W)
    y = jax.lax.conv_general_dilated(
        cat, weight.astype(jnp.float32),
        window_strides=(1, 1), padding=((PAD, PAD), (PAD, PAD)),
        dimension_numbers=("NCHW", "OIHW", "NCHW"))
    return jax.nn.sigmoid(y).astype(x.dtype)


if __name__ == "__main__":
    key = jax.random.PRNGKey(0)
    kx, kw, kx2 = jax.random.split(key, 3)

    B, C, H, W = 2, 4, 16, 16
    x = jax.random.normal(kx, (B, C, H, W), dtype=jnp.float32)

    # Deterministic conv weight (kaiming-uniform style, like nn.Conv2d default).
    fan_in = 2 * KSIZE * KSIZE
    bound = 1.0 / (fan_in ** 0.5)
    weight = jax.random.uniform(
        kw, (1, 2, KSIZE, KSIZE), dtype=jnp.float32, minval=-bound, maxval=bound)

    out = jax.block_until_ready(spatial_attention(x, weight))
    ref = spatial_attention_ref(x, weight)
    assert out.shape == (B, 1, H, W)
    assert jnp.allclose(out, ref, atol=1e-5, rtol=1e-5), "mismatch vs reference (test 1)"

    # Second config exercises the multi-step channel reduction (n_c > 1) and,
    # where supported, the triple-buffered streaming path.
    x2 = jax.random.normal(kx2, (1, 16, 8, 32), dtype=jnp.float32)
    out2 = jax.block_until_ready(spatial_attention(x2, weight, c_tile=8))
    ref2 = spatial_attention_ref(x2, weight)
    assert jnp.allclose(out2, ref2, atol=1e-5, rtol=1e-5), "mismatch vs reference (test 2)"

    print("KERNEL_OK")
</pallas_src>

<mosaic_0001>
module attributes {stable_mosaic.version = 11 : i64} {
  func.func @kernel(%arg0: i32, %arg1: i32, %arg2: memref<98xf32, #tpu.memory_space<smem>>, %arg3: memref<1x4x16x16xf32, #tpu.memory_space<vmem>>, %arg4: memref<1x1x16x16xf32, #tpu.memory_space<vmem>>, %arg5: memref<16x16xf32, #tpu.memory_space<vmem>>, %arg6: memref<16x16xf32, #tpu.memory_space<vmem>>, %arg7: memref<2x22x22xf32, #tpu.memory_space<vmem>>) attributes {dimension_semantics = [#tpu.dimension_semantics<parallel>, #tpu.dimension_semantics<arbitrary>], iteration_bounds = array<i64: 2, 1>, scalar_prefetch = 0 : i64, scratch_operands = 3 : i64, tpu.core_type = #tpu.core_type<tc>, window_params = [{transform_indices = @transform_0, window_bounds = array<i64: 98>}, {transform_indices = @transform_1, window_bounds = array<i64: 1, 4, 16, 16>}, {transform_indices = @transform_2, window_bounds = array<i64: 1, 1, 16, 16>}]} {
    %c0_i32 = arith.constant 0 : i32
    %0 = arith.cmpi eq, %arg1, %c0_i32 : i32
    %1 = arith.extui %0 : i1 to i32
    %c0_i32_0 = arith.constant 0 : i32
    %2 = arith.cmpi ne, %1, %c0_i32_0 : i32
    scf.if %2 {
      %cst_15 = arith.constant 0.000000e+00 : f32
      %16 = vector.broadcast %cst_15 : f32 to vector<16x16xf32>
      %c0_16 = arith.constant 0 : index
      %c0_17 = arith.constant 0 : index
      %17 = vector.load %arg5[%c0_16, %c0_17] : memref<16x16xf32, #tpu.memory_space<vmem>>, vector<16x16xf32>
      tpu.vector_store %arg5[%c0_16, %c0_17], %16 {strides = array<i32>} : memref<16x16xf32, #tpu.memory_space<vmem>>, vector<16x16xf32>,
      %cst_18 = arith.constant 0xFF800000 : f32
      %18 = vector.broadcast %cst_18 : f32 to vector<16x16xf32>
      %c0_19 = arith.constant 0 : index
      %c0_20 = arith.constant 0 : index
      %19 = vector.load %arg6[%c0_19, %c0_20] : memref<16x16xf32, #tpu.memory_space<vmem>>, vector<16x16xf32>
      tpu.vector_store %arg6[%c0_19, %c0_20], %18 {strides = array<i32>} : memref<16x16xf32, #tpu.memory_space<vmem>>, vector<16x16xf32>,
    } else {
    }
    %c0 = arith.constant 0 : index
    %c0_1 = arith.constant 0 : index
    %c0_2 = arith.constant 0 : index
    %c0_3 = arith.constant 0 : index
    %3 = vector.load %arg3[%c0, %c0_1, %c0_2, %c0_3] : memref<1x4x16x16xf32, #tpu.memory_space<vmem>>, vector<1x4x16x16xf32>
    %4 = vector.shape_cast %3 : vector<1x4x16x16xf32> to vector<4x16x16xf32>
    %c0_4 = arith.constant 0 : index
    %c0_5 = arith.constant 0 : index
    %5 = vector.load %arg5[%c0_4, %c0_5] : memref<16x16xf32, #tpu.memory_space<vmem>>, vector<16x16xf32>
    %cst = arith.constant dense<0.000000e+00> : vector<16x16xf32>
    %6 = vector.multi_reduction <add>, %4, %cst [0] : vector<4x16x16xf32> to vector<16x16xf32>
    %7 = arith.addf %5, %6 : vector<16x16xf32>
    %c0_6 = arith.constant 0 : index
    %c0_7 = arith.constant 0 : index
    %8 = vector.load %arg5[%c0_6, %c0_7] : memref<16x16xf32, #tpu.memory_space<vmem>>, vector<16x16xf32>
    tpu.vector_store %arg5[%c0_6, %c0_7], %7 {strides = array<i32>} : memref<16x16xf32, #tpu.memory_space<vmem>>, vector<16x16xf32>,
    %c0_8 = arith.constant 0 : index
    %c0_9 = arith.constant 0 : index
    %9 = vector.load %arg6[%c0_8, %c0_9] : memref<16x16xf32, #tpu.memory_space<vmem>>, vector<16x16xf32>
    %cst_10 = arith.constant dense<0xFF800000> : vector<16x16xf32>
    %10 = vector.multi_reduction <maximumf>, %4, %cst_10 [0] : vector<4x16x16xf32> to vector<16x16xf32>
    %11 = arith.maximumf %9, %10 : vector<16x16xf32>
    %c0_11 = arith.constant 0 : index
    %c0_12 = arith.constant 0 : index
    %12 = vector.load %arg6[%c0_11, %c0_12] : memref<16x16xf32, #tpu.memory_space<vmem>>, vector<16x16xf32>
    tpu.vector_store %arg6[%c0_11, %c0_12], %11 {strides = array<i32>} : memref<16x16xf32, #tpu.memory_space<vmem>>, vector<16x16xf32>,
    %c0_i32_13 = arith.constant 0 : i32
    %13 = arith.cmpi eq, %arg1, %c0_i32_13 : i32
    %14 = arith.extui %13 : i1 to i32
    %c0_i32_14 = arith.constant 0 : i32
    %15 = arith.cmpi ne, %14, %c0_i32_14 : i32
    scf.if %15 {
      %cst_15 = arith.constant 0.000000e+00 : f32
      %16 = vector.broadcast %cst_15 : f32 to vector<2x22x22xf32>
      %c0_16 = arith.constant 0 : index
      %c0_17 = arith.constant 0 : index
      %c0_18 = arith.constant 0 : index
      %17 = vector.load %arg7[%c0_16, %c0_17, %c0_18] : memref<2x22x22xf32, #tpu.memory_space<vmem>>, vector<2x22x22xf32>
      tpu.vector_store %arg7[%c0_16, %c0_17, %c0_18], %16 {strides = array<i32>} : memref<2x22x22xf32, #tpu.memory_space<vmem>>, vector<2x22x22xf32>,
      %c0_19 = arith.constant 0 : index
      %c0_20 = arith.constant 0 : index
      %18 = vector.load %arg5[%c0_19, %c0_20] : memref<16x16xf32, #tpu.memory_space<vmem>>, vector<16x16xf32>
      %c0_21 = arith.constant 0 : index
      %c3 = arith.constant 3 : index
      %c3_22 = arith.constant 3 : index
      %19 = vector.load %arg7[%c0_21, %c3, %c3_22] : memref<2x22x22xf32, #tpu.memory_space<vmem>>, vector<1x16x16xf32>
      %20 = vector.shape_cast %19 : vector<1x16x16xf32> to vector<16x16xf32>
      %21 = vector.shape_cast %18 : vector<16x16xf32> to vector<1x16x16xf32>
      tpu.vector_store %arg7[%c0_21, %c3, %c3_22], %21 {strides = array<i32>} : memref<2x22x22xf32, #tpu.memory_space<vmem>>, vector<1x16x16xf32>,
      %c0_23 = arith.constant 0 : index
      %c0_24 = arith.constant 0 : index
      %22 = vector.load %arg6[%c0_23, %c0_24] : memref<16x16xf32, #tpu.memory_space<vmem>>, vector<16x16xf32>
      %c1 = arith.constant 1 : index
      %c3_25 = arith.constant 3 : index
      %c3_26 = arith.constant 3 : index
      %23 = vector.load %arg7[%c1, %c3_25, %c3_26] : memref<2x22x22xf32, #tpu.memory_space<vmem>>, vector<1x16x16xf32>
      %24 = vector.shape_cast %23 : vector<1x16x16xf32> to vector<16x16xf32>
      %25 = vector.shape_cast %22 : vector<16x16xf32> to vector<1x16x16xf32>
      tpu.vector_store %arg7[%c1, %c3_25, %c3_26], %25 {strides = array<i32>} : memref<2x22x22xf32, #tpu.memory_space<vmem>>, vector<1x16x16xf32>,
      %cst_27 = arith.constant 0.000000e+00 : f32
      %26 = vector.broadcast %cst_27 : f32 to vector<16x16xf32>
      %cst_28 = arith.constant 0.000000e+00 : f32
      %27 = vector.broadcast %cst_28 : f32 to vector<16x16xf32>
      %cst_29 = arith.constant 0.000000e+00 : f32
      %28 = vector.broadcast %cst_29 : f32 to vector<16x16xf32>
      %cst_30 = arith.constant 0.000000e+00 : f32
      %29 = vector.broadcast %cst_30 : f32 to vector<16x16xf32>
      %c0_31 = arith.constant 0 : index
      %30 = memref.load %arg2[%c0_31] : memref<98xf32, #tpu.memory_space<smem>>
      %c49 = arith.constant 49 : index
      %31 = memref.load %arg2[%c49] : memref<98xf32, #tpu.memory_space<smem>>
      %c0_32 = arith.constant 0 : index
      %c0_33 = arith.constant 0 : index
      %c0_34 = arith.constant 0 : index
      %32 = vector.load %arg7[%c0_32, %c0_33, %c0_34] : memref<2x22x22xf32, #tpu.memory_space<vmem>>, vector<1x16x16xf32>
      %33 = vector.shape_cast %32 : vector<1x16x16xf32> to vector<16x16xf32>
      %34 = vector.broadcast %30 : f32 to vector<16x16xf32>
      %35 = arith.mulf %34, %33 : vector<16x16xf32>
      %36 = arith.addf %26, %35 : vector<16x16xf32>
      %c1_35 = arith.constant 1 : index
      %c0_36 = arith.constant 0 : index
      %c0_37 = arith.constant 0 : index
      %37 = vector.load %arg7[%c1_35, %c0_36, %c0_37] : memref<2x22x22xf32, #tpu.memory_space<vmem>>, vector<1x16x16xf32>
      %38 = vector.shape_cast %37 : vector<1x16x16xf32> to vector<16x16xf32>
      %39 = vector.broadcast %31 : f32 to vector<16x16xf32>
      %40 = arith.mulf %39, %38 : vector<16x16xf32>
      %41 = arith.addf %28, %40 : vector<16x16xf32>
      %c1_38 = arith.constant 1 : index
      %42 = memref.load %arg2[%c1_38] : memref<98xf32, #tpu.memory_space<smem>>
      %c50 = arith.constant 50 : index
      %43 = memref.load %arg2[%c50] : memref<98xf32, #tpu.memory_space<smem>>
      %c0_39 = arith.constant 0 : index
      %c0_40 = arith.constant 0 : index
      %c1_41 = arith.constant 1 : index
      %44 = vector.load %arg7[%c0_39, %c0_40, %c1_41] : memref<2x22x22xf32, #tpu.memory_space<vmem>>, vector<1x16x16xf32>
      %45 = vector.shape_cast %44 : vector<1x16x16xf32> to vector<16x16xf32>
      %46 = vector.broadcast %42 : f32 to vector<16x16xf32>
      %47 = arith.mulf %46, %45 : vector<16x16xf32>
      %48 = arith.addf %27, %47 : vector<16x16xf32>
      %c1_42 = arith.constant 1 : index
      %c0_43 = arith.constant 0 : index
      %c1_44 = arith.constant 1 : index
      %49 = vector.load %arg7[%c1_42, %c0_43, %c1_44] : memref<2x22x22xf32, #tpu.memory_space<vmem>>, vector<1x16x16xf32>
      %50 = vector.shape_cast %49 : vector<1x16x16xf32> to vector<16x16xf32>
      %51 = vector.broadcast %43 : f32 to vector<16x16xf32>
      %52 = arith.mulf %51, %50 : vector<16x16xf32>
      %53 = arith.addf %29, %52 : vector<16x16xf32>
      %c2 = arith.constant 2 : index
      %54 = memref.load %arg2[%c2] : memref<98xf32, #tpu.memory_space<smem>>
      %c51 = arith.constant 51 : index
      %55 = memref.load %arg2[%c51] : memref<98xf32, #tpu.memory_space<smem>>
      %c0_45 = arith.constant 0 : index
      %c0_46 = arith.constant 0 : index
      %c2_47 = arith.constant 2 : index
      %56 = vector.load %arg7[%c0_45, %c0_46, %c2_47] : memref<2x22x22xf32, #tpu.memory_space<vmem>>, vector<1x16x16xf32>
      %57 = vector.shape_cast %56 : vector<1x16x16xf32> to vector<16x16xf32>
      %58 = vector.broadcast %54 : f32 to vector<16x16xf32>
      %59 = arith.mulf %58, %57 : vector<16x16xf32>
      %60 = arith.addf %36, %59 : vector<16x16xf32>
      %c1_48 = arith.constant 1 : index
      %c0_49 = arith.constant 0 : index
      %c2_50 = arith.constant 2 : index
      %61 = vector.load %arg7[%c1_48, %c0_49, %c2_50] : memref<2x22x22xf32, #tpu.memory_space<vmem>>, vector<1x16x16xf32>
      %62 = vector.shape_cast %61 : vector<1x16x16xf32> to vector<16x16xf32>
      %63 = vector.broadcast %55 : f32 to vector<16x16xf32>
      %64 = arith.mulf %63, %62 : vector<16x16xf32>
      %65 = arith.addf %41, %64 : vector<16x16xf32>
      %c3_51 = arith.constant 3 : index
      %66 = memref.load %arg2[%c3_51] : memref<98xf32, #tpu.memory_space<smem>>
      %c52 = arith.constant 52 : index
      %67 = memref.load %arg2[%c52] : memref<98xf32, #tpu.memory_space<smem>>
      %c0_52 = arith.constant 0 : index
      %c0_53 = arith.constant 0 : index
      %c3_54 = arith.constant 3 : index
      %68 = vector.load %arg7[%c0_52, %c0_53, %c3_54] : memref<2x22x22xf32, #tpu.memory_space<vmem>>, vector<1x16x16xf32>
      %69 = vector.shape_cast %68 : vector<1x16x16xf32> to vector<16x16xf32>
      %70 = vector.broadcast %66 : f32 to vector<16x16xf32>
      %71 = arith.mulf %70, %69 : vector<16x16xf32>
      %72 = arith.addf %48, %71 : vector<16x16xf32>
      %c1_55 = arith.constant 1 : index
      %c0_56 = arith.constant 0 : index
      %c3_57 = arith.constant 3 : index
      %73 = vector.load %arg7[%c1_55, %c0_56, %c3_57] : memref<2x22x22xf32, #tpu.memory_space<vmem>>, vector<1x16x16xf32>
      %74 = vector.shape_cast %73 : vector<1x16x16xf32> to vector<16x16xf32>
      %75 = vector.broadcast %67 : f32 to vector<16x16xf32>
      %76 = arith.mulf %75, %74 : vector<16x16xf32>
      %77 = arith.addf %53, %76 : vector<16x16xf32>
      %c4 = arith.constant 4 : index
      %78 = memref.load %arg2[%c4] : memref<98xf32, #tpu.memory_space<smem>>
      %c53 = arith.constant 53 : index
      %79 = memref.load %arg2[%c53] : memref<98xf32, #tpu.memory_space<smem>>
      %c0_58 = arith.constant 0 : index
      %c0_59 = arith.constant 0 : index
      %c4_60 = arith.constant 4 : index
      %80 = vector.load %arg7[%c0_58, %c0_59, %c4_60] : memref<2x22x22xf32, #tpu.memory_space<vmem>>, vector<1x16x16xf32>
      %81 = vector.shape_cast %80 : vector<1x16x16xf32> to vector<16x16xf32>
      %82 = vector.broadcast %78 : f32 to vector<16x16xf32>
      %83 = arith.mulf %82, %81 : vector<16x16xf32>
      %84 = arith.addf %60, %83 : vector<16x16xf32>
      %c1_61 = arith.constant 1 : index
      %c0_62 = arith.constant 0 : index
      %c4_63 = arith.constant 4 : index
      %85 = vector.load %arg7[%c1_61, %c0_62, %c4_63] : memref<2x22x22xf32, #tpu.memory_space<vmem>>, vector<1x16x16xf32>
      %86 = vector.shape_cast %85 : vector<1x16x16xf32> to vector<16x16xf32>
      %87 = vector.broadcast %79 : f32 to vector<16x16xf32>
      %88 = arith.mulf %87, %86 : vector<16x16xf32>
      %89 = arith.addf %65, %88 : vector<16x16xf32>
      %c5 = arith.constant 5 : index
      %90 = memref.load %arg2[%c5] : memref<98xf32, #tpu.memory_space<smem>>
      %c54 = arith.constant 54 : index
      %91 = memref.load %arg2[%c54] : memref<98xf32, #tpu.memory_space<smem>>
      %c0_64 = arith.constant 0 : index
      %c0_65 = arith.constant 0 : index
      %c5_66 = arith.constant 5 : index
      %92 = vector.load %arg7[%c0_64, %c0_65, %c5_66] : memref<2x22x22xf32, #tpu.memory_space<vmem>>, vector<1x16x16xf32>
      %93 = vector.shape_cast %92 : vector<1x16x16xf32> to vector<16x16xf32>
      %94 = vector.broadcast %90 : f32 to vector<16x16xf32>
      %95 = arith.mulf %94, %93 : vector<16x16xf32>
      %96 = arith.addf %72, %95 : vector<16x16xf32>
      %c1_67 = arith.constant 1 : index
      %c0_68 = arith.constant 0 : index
      %c5_69 = arith.constant 5 : index
      %97 = vector.load %arg7[%c1_67, %c0_68, %c5_69] : memref<2x22x22xf32, #tpu.memory_space<vmem>>, vector<1x16x16xf32>
      %98 = vector.shape_cast %97 : vector<1x16x16xf32> to vector<16x16xf32>
      %99 = vector.broadcast %91 : f32 to vector<16x16xf32>
      %100 = arith.mulf %99, %98 : vector<16x16xf32>
      %101 = arith.addf %77, %100 : vector<16x16xf32>
      %c6 = arith.constant 6 : index
      %102 = memref.load %arg2[%c6] : memref<98xf32, #tpu.memory_space<smem>>
      %c55 = arith.constant 55 : index
      %103 = memref.load %arg2[%c55] : memref<98xf32, #tpu.memory_space<smem>>
      %c0_70 = arith.constant 0 : index
      %c0_71 = arith.constant 0 : index
      %c6_72 = arith.constant 6 : index
      %104 = vector.load %arg7[%c0_70, %c0_71, %c6_72] : memref<2x22x22xf32, #tpu.memory_space<vmem>>, vector<1x16x16xf32>
      %105 = vector.shape_cast %104 : vector<1x16x16xf32> to vector<16x16xf32>
      %106 = vector.broadcast %102 : f32 to vector<16x16xf32>
      %107 = arith.mulf %106, %105 : vector<16x16xf32>
      %108 = arith.addf %84, %107 : vector<16x16xf32>
      %c1_73 = arith.constant 1 : index
      %c0_74 = arith.constant 0 : index
      %c6_75 = arith.constant 6 : index
      %109 = vector.load %arg7[%c1_73, %c0_74, %c6_75] : memref<2x22x22xf32, #tpu.memory_space<vmem>>, vector<1x16x16xf32>
      %110 = vector.shape_cast %109 : vector<1x16x16xf32> to vector<16x16xf32>
      %111 = vector.broadcast %103 : f32 to vector<16x16xf32>
      %112 = arith.mulf %111, %110 : vector<16x16xf32>
      %113 = arith.addf %89, %112 : vector<16x16xf32>
      %c7 = arith.constant 7 : index
      %114 = memref.load %arg2[%c7] : memref<98xf32, #tpu.memory_space<smem>>
      %c56 = arith.constant 56 : index
      %115 = memref.load %arg2[%c56] : memref<98xf32, #tpu.memory_space<smem>>
      %c0_76 = arith.constant 0 : index
      %c1_77 = arith.constant 1 : index
      %c0_78 = arith.constant 0 : index
      %116 = vector.load %arg7[%c0_76, %c1_77, %c0_78] : memref<2x22x22xf32, #tpu.memory_space<vmem>>, vector<1x16x16xf32>
      %117 = vector.shape_cast %116 : vector<1x16x16xf32> to vector<16x16xf32>
      %118 = vector.broadcast %114 : f32 to vector<16x16xf32>
      %119 = arith.mulf %118, %117 : vector<16x16xf32>
      %120 = arith.addf %96, %119 : vector<16x16xf32>
      %c1_79 = arith.constant 1 : index
      %c1_80 = arith.constant 1 : index
      %c0_81 = arith.constant 0 : index
      %121 = vector.load %arg7[%c1_79, %c1_80, %c0_81] : memref<2x22x22xf32, #tpu.memory_space<vmem>>, vector<1x16x16xf32>
      %122 = vector.shape_cast %121 : vector<1x16x16xf32> to vector<16x16xf32>
      %123 = vector.broadcast %115 : f32 to vector<16x16xf32>
      %124 = arith.mulf %123, %122 : vector<16x16xf32>
      %125 = arith.addf %101, %124 : vector<16x16xf32>
      %c8 = arith.constant 8 : index
      %126 = memref.load %arg2[%c8] : memref<98xf32, #tpu.memory_space<smem>>
      %c57 = arith.constant 57 : index
      %127 = memref.load %arg2[%c57] : memref<98xf32, #tpu.memory_space<smem>>
      %c0_82 = arith.constant 0 : index
      %c1_83 = arith.constant 1 : index
      %c1_84 = arith.constant 1 : index
      %128 = vector.load %arg7[%c0_82, %c1_83, %c1_84] : memref<2x22x22xf32, #tpu.memory_space<vmem>>, vector<1x16x16xf32>
      %129 = vector.shape_cast %128 : vector<1x16x16xf32> to vector<16x16xf32>
      %130 = vector.broadcast %126 : f32 to vector<16x16xf32>
      %131 = arith.mulf %130, %129 : vector<16x16xf32>
      %132 = arith.addf %108, %131 : vector<16x16xf32>
      %c1_85 = arith.constant 1 : index
      %c1_86 = arith.constant 1 : index
      %c1_87 = arith.constant 1 : index
      %133 = vector.load %arg7[%c1_85, %c1_86, %c1_87] : memref<2x22x22xf32, #tpu.memory_space<vmem>>, vector<1x16x16xf32>
      %134 = vector.shape_cast %133 : vector<1x16x16xf32> to vector<16x16xf32>
      %135 = vector.broadcast %127 : f32 to vector<16x16xf32>
      %136 = arith.mulf %135, %134 : vector<16x16xf32>
      %137 = arith.addf %113, %136 : vector<16x16xf32>
      %c9 = arith.constant 9 : index
      %138 = memref.load %arg2[%c9] : memref<98xf32, #tpu.memory_space<smem>>
      %c58 = arith.constant 58 : index
      %139 = memref.load %arg2[%c58] : memref<98xf32, #tpu.memory_space<smem>>
      %c0_88 = arith.constant 0 : index
      %c1_89 = arith.constant 1 : index
      %c2_90 = arith.constant 2 : index
      %140 = vector.load %arg7[%c0_88, %c1_89, %c2_90] : memref<2x22x22xf32, #tpu.memory_space<vmem>>, vector<1x16x16xf32>
      %141 = vector.shape_cast %140 : vector<1x16x16xf32> to vector<16x16xf32>
      %142 = vector.broadcast %138 : f32 to vector<16x16xf32>
      %143 = arith.mulf %142, %141 : vector<16x16xf32>
      %144 = arith.addf %120, %143 : vector<16x16xf32>
      %c1_91 = arith.constant 1 : index
      %c1_92 = arith.constant 1 : index
      %c2_93 = arith.constant 2 : index
      %145 = vector.load %arg7[%c1_91, %c1_92, %c2_93] : memref<2x22x22xf32, #tpu.memory_space<vmem>>, vector<1x16x16xf32>
      %146 = vector.shape_cast %145 : vector<1x16x16xf32> to vector<16x16xf32>
      %147 = vector.broadcast %139 : f32 to vector<16x16xf32>
      %148 = arith.mulf %147, %146 : vector<16x16xf32>
      %149 = arith.addf %125, %148 : vector<16x16xf32>
      %c10 = arith.constant 10 : index
      %150 = memref.load %arg2[%c10] : memref<98xf32, #tpu.memory_space<smem>>
      %c59 = arith.constant 59 : index
      %151 = memref.load %arg2[%c59] : memref<98xf32, #tpu.memory_space<smem>>
      %c0_94 = arith.constant 0 : index
      %c1_95 = arith.constant 1 : index
      %c3_96 = arith.constant 3 : index
      %152 = vector.load %arg7[%c0_94, %c1_95, %c3_96] : memref<2x22x22xf32, #tpu.memory_space<vmem>>, vector<1x16x16xf32>
      %153 = vector.shape_cast %152 : vector<1x16x16xf32> to vector<16x16xf32>
      %154 = vector.broadcast %150 : f32 to vector<16x16xf32>
      %155 = arith.mulf %154, %153 : vector<16x16xf32>
      %156 = arith.addf %132, %155 : vector<16x16xf32>
      %c1_97 = arith.constant 1 : index
      %c1_98 = arith.constant 1 : index
      %c3_99 = arith.constant 3 : index
      %157 = vector.load %arg7[%c1_97, %c1_98, %c3_99] : memref<2x22x22xf32, #tpu.memory_space<vmem>>, vector<1x16x16xf32>
      %158 = vector.shape_cast %157 : vector<1x16x16xf32> to vector<16x16xf32>
      %159 = vector.broadcast %151 : f32 to vector<16x16xf32>
      %160 = arith.mulf %159, %158 : vector<16x16xf32>
      %161 = arith.addf %137, %160 : vector<16x16xf32>
      %c11 = arith.constant 11 : index
      %162 = memref.load %arg2[%c11] : memref<98xf32, #tpu.memory_space<smem>>
      %c60 = arith.constant 60 : index
      %163 = memref.load %arg2[%c60] : memref<98xf32, #tpu.memory_space<smem>>
      %c0_100 = arith.constant 0 : index
      %c1_101 = arith.constant 1 : index
      %c4_102 = arith.constant 4 : index
      %164 = vector.load %arg7[%c0_100, %c1_101, %c4_102] : memref<2x22x22xf32, #tpu.memory_space<vmem>>, vector<1x16x16xf32>
      %165 = vector.shape_cast %164 : vector<1x16x16xf32> to vector<16x16xf32>
      %166 = vector.broadcast %162 : f32 to vector<16x16xf32>
      %167 = arith.mulf %166, %165 : vector<16x16xf32>
      %168 = arith.addf %144, %167 : vector<16x16xf32>
      %c1_103 = arith.constant 1 : index
      %c1_104 = arith.constant 1 : index
      %c4_105 = arith.constant 4 : index
      %169 = vector.load %arg7[%c1_103, %c1_104, %c4_105] : memref<2x22x22xf32, #tpu.memory_space<vmem>>, vector<1x16x16xf32>
      %170 = vector.shape_cast %169 : vector<1x16x16xf32> to vector<16x16xf32>
      %171 = vector.broadcast %163 : f32 to vector<16x16xf32>
      %172 = arith.mulf %171, %170 : vector<16x16xf32>
      %173 = arith.addf %149, %172 : vector<16x16xf32>
      %c12 = arith.constant 12 : index
      %174 = memref.load %arg2[%c12] : memref<98xf32, #tpu.memory_space<smem>>
      %c61 = arith.constant 61 : index
      %175 = memref.load %arg2[%c61] : memref<98xf32, #tpu.memory_space<smem>>
      %c0_106 = arith.constant 0 : index
      %c1_107 = arith.constant 1 : index
      %c5_108 = arith.constant 5 : index
      %176 = vector.load %arg7[%c0_106, %c1_107, %c5_108] : memref<2x22x22xf32, #tpu.memory_space<vmem>>, vector<1x16x16xf32>
      %177 = vector.shape_cast %176 : vector<1x16x16xf32> to vector<16x16xf32>
      %178 = vector.broadcast %174 : f32 to vector<16x16xf32>
      %179 = arith.mulf %178, %177 : vector<16x16xf32>
      %180 = arith.addf %156, %179 : vector<16x16xf32>
      %c1_109 = arith.constant 1 : index
      %c1_110 = arith.constant 1 : index
      %c5_111 = arith.constant 5 : index
      %181 = vector.load %arg7[%c1_109, %c1_110, %c5_111] : memref<2x22x22xf32, #tpu.memory_space<vmem>>, vector<1x16x16xf32>
      %182 = vector.shape_cast %181 : vector<1x16x16xf32> to vector<16x16xf32>
      %183 = vector.broadcast %175 : f32 to vector<16x16xf32>
      %184 = arith.mulf %183, %182 : vector<16x16xf32>
      %185 = arith.addf %161, %184 : vector<16x16xf32>
      %c13 = arith.constant 13 : index
      %186 = memref.load %arg2[%c13] : memref<98xf32, #tpu.memory_space<smem>>
      %c62 = arith.constant 62 : index
      %187 = memref.load %arg2[%c62] : memref<98xf32, #tpu.memory_space<smem>>
      %c0_112 = arith.constant 0 : index
      %c1_113 = arith.constant 1 : index
      %c6_114 = arith.constant 6 : index
      %188 = vector.load %arg7[%c0_112, %c1_113, %c6_114] : memref<2x22x22xf32, #tpu.memory_space<vmem>>, vector<1x16x16xf32>
      %189 = vector.shape_cast %188 : vector<1x16x16xf32> to vector<16x16xf32>
      %190 = vector.broadcast %186 : f32 to vector<16x16xf32>
      %191 = arith.mulf %190, %189 : vector<16x16xf32>
      %192 = arith.addf %168, %191 : vector<16x16xf32>
      %c1_115 = arith.constant 1 : index
      %c1_116 = arith.constant 1 : index
      %c6_117 = arith.constant 6 : index
      %193 = vector.load %arg7[%c1_115, %c1_116, %c6_117] : memref<2x22x22xf32, #tpu.memory_space<vmem>>, vector<1x16x16xf32>
      %194 = vector.shape_cast %193 : vector<1x16x16xf32> to vector<16x16xf32>
      %195 = vector.broadcast %187 : f32 to vector<16x16xf32>
      %196 = arith.mulf %195, %194 : vector<16x16xf32>
      %197 = arith.addf %173, %196 : vector<16x16xf32>
      %c14 = arith.constant 14 : index
      %198 = memref.load %arg2[%c14] : memref<98xf32, #tpu.memory_space<smem>>
      %c63 = arith.constant 63 : index
      %199 = memref.load %arg2[%c63] : memref<98xf32, #tpu.memory_space<smem>>
      %c0_118 = arith.constant 0 : index
      %c2_119 = arith.constant 2 : index
      %c0_120 = arith.constant 0 : index
      %200 = vector.load %arg7[%c0_118, %c2_119, %c0_120] : memref<2x22x22xf32, #tpu.memory_space<vmem>>, vector<1x16x16xf32>
      %201 = vector.shape_cast %200 : vector<1x16x16xf32> to vector<16x16xf32>
      %202 = vector.broadcast %198 : f32 to vector<16x16xf32>
      %203 = arith.mulf %202, %201 : vector<16x16xf32>
      %204 = arith.addf %180, %203 : vector<16x16xf32>
      %c1_121 = arith.constant 1 : index
      %c2_122 = arith.constant 2 : index
      %c0_123 = arith.constant 0 : index
      %205 = vector.load %arg7[%c1_121, %c2_122, %c0_123] : memref<2x22x22xf32, #tpu.memory_space<vmem>>, vector<1x16x16xf32>
      %206 = vector.shape_cast %205 : vector<1x16x16xf32> to vector<16x16xf32>
      %207 = vector.broadcast %199 : f32 to vector<16x16xf32>
      %208 = arith.mulf %207, %206 : vector<16x16xf32>
      %209 = arith.addf %185, %208 : vector<16x16xf32>
      %c15 = arith.constant 15 : index
      %210 = memref.load %arg2[%c15] : memref<98xf32, #tpu.memory_space<smem>>
      %c64 = arith.constant 64 : index
      %211 = memref.load %arg2[%c64] : memref<98xf32, #tpu.memory_space<smem>>
      %c0_124 = arith.constant 0 : index
      %c2_125 = arith.constant 2 : index
      %c1_126 = arith.constant 1 : index
      %212 = vector.load %arg7[%c0_124, %c2_125, %c1_126] : memref<2x22x22xf32, #tpu.memory_space<vmem>>, vector<1x16x16xf32>
      %213 = vector.shape_cast %212 : vector<1x16x16xf32> to vector<16x16xf32>
      %214 = vector.broadcast %210 : f32 to vector<16x16xf32>
      %215 = arith.mulf %214, %213 : vector<16x16xf32>
      %216 = arith.addf %192, %215 : vector<16x16xf32>
      %c1_127 = arith.constant 1 : index
      %c2_128 = arith.constant 2 : index
      %c1_129 = arith.constant 1 : index
      %217 = vector.load %arg7[%c1_127, %c2_128, %c1_129] : memref<2x22x22xf32, #tpu.memory_space<vmem>>, vector<1x16x16xf32>
      %218 = vector.shape_cast %217 : vector<1x16x16xf32> to vector<16x16xf32>
      %219 = vector.broadcast %211 : f32 to vector<16x16xf32>
      %220 = arith.mulf %219, %218 : vector<16x16xf32>
      %221 = arith.addf %197, %220 : vector<16x16xf32>
      %c16 = arith.constant 16 : index
      %222 = memref.load %arg2[%c16] : memref<98xf32, #tpu.memory_space<smem>>
      %c65 = arith.constant 65 : index
      %223 = memref.load %arg2[%c65] : memref<98xf32, #tpu.memory_space<smem>>
      %c0_130 = arith.constant 0 : index
      %c2_131 = arith.constant 2 : index
      %c2_132 = arith.constant 2 : index
      %224 = vector.load %arg7[%c0_130, %c2_131, %c2_132] : memref<2x22x22xf32, #tpu.memory_space<vmem>>, vector<1x16x16xf32>
      %225 = vector.shape_cast %224 : vector<1x16x16xf32> to vector<16x16xf32>
      %226 = vector.broadcast %222 : f32 to vector<16x16xf32>
      %227 = arith.mulf %226, %225 : vector<16x16xf32>
      %228 = arith.addf %204, %227 : vector<16x16xf32>
      %c1_133 = arith.constant 1 : index
      %c2_134 = arith.constant 2 : index
      %c2_135 = arith.constant 2 : index
      %229 = vector.load %arg7[%c1_133, %c2_134, %c2_135] : memref<2x22x22xf32, #tpu.memory_space<vmem>>, vector<1x16x16xf32>
      %230 = vector.shape_cast %229 : vector<1x16x16xf32> to vector<16x16xf32>
      %231 = vector.broadcast %223 : f32 to vector<16x16xf32>
      %232 = arith.mulf %231, %230 : vector<16x16xf32>
      %233 = arith.addf %209, %232 : vector<16x16xf32>
      %c17 = arith.constant 17 : index
      %234 = memref.load %arg2[%c17] : memref<98xf32, #tpu.memory_space<smem>>
      %c66 = arith.constant 66 : index
      %235 = memref.load %arg2[%c66] : memref<98xf32, #tpu.memory_space<smem>>
      %c0_136 = arith.constant 0 : index
      %c2_137 = arith.constant 2 : index
      %c3_138 = arith.constant 3 : index
      %236 = vector.load %arg7[%c0_136, %c2_137, %c3_138] : memref<2x22x22xf32, #tpu.memory_space<vmem>>, vector<1x16x16xf32>
      %237 = vector.shape_cast %236 : vector<1x16x16xf32> to vector<16x16xf32>
      %238 = vector.broadcast %234 : f32 to vector<16x16xf32>
      %239 = arith.mulf %238, %237 : vector<16x16xf32>
      %240 = arith.addf %216, %239 : vector<16x16xf32>
      %c1_139 = arith.constant 1 : index
      %c2_140 = arith.constant 2 : index
      %c3_141 = arith.constant 3 : index
      %241 = vector.load %arg7[%c1_139, %c2_140, %c3_141] : memref<2x22x22xf32, #tpu.memory_space<vmem>>, vector<1x16x16xf32>
      %242 = vector.shape_cast %241 : vector<1x16x16xf32> to vector<16x16xf32>
      %243 = vector.broadcast %235 : f32 to vector<16x16xf32>
      %244 = arith.mulf %243, %242 : vector<16x16xf32>
      %245 = arith.addf %221, %244 : vector<16x16xf32>
      %c18 = arith.constant 18 : index
      %246 = memref.load %arg2[%c18] : memref<98xf32, #tpu.memory_space<smem>>
      %c67 = arith.constant 67 : index
      %247 = memref.load %arg2[%c67] : memref<98xf32, #tpu.memory_space<smem>>
      %c0_142 = arith.constant 0 : index
      %c2_143 = arith.constant 2 : index
      %c4_144 = arith.constant 4 : index
      %248 = vector.load %arg7[%c0_142, %c2_143, %c4_144] : memref<2x22x22xf32, #tpu.memory_space<vmem>>, vector<1x16x16xf32>
      %249 = vector.shape_cast %248 : vector<1x16x16xf32> to vector<16x16xf32>
      %250 = vector.broadcast %246 : f32 to vector<16x16xf32>
      %251 = arith.mulf %250, %249 : vector<16x16xf32>
      %252 = arith.addf %228, %251 : vector<16x16xf32>
      %c1_145 = arith.constant 1 : index
      %c2_146 = arith.constant 2 : index
      %c4_147 = arith.constant 4 : index
      %253 = vector.load %arg7[%c1_145, %c2_146, %c4_147] : memref<2x22x22xf32, #tpu.memory_space<vmem>>, vector<1x16x16xf32>
      %254 = vector.shape_cast %253 : vector<1x16x16xf32> to vector<16x16xf32>
      %255 = vector.broadcast %247 : f32 to vector<16x16xf32>
      %256 = arith.mulf %255, %254 : vector<16x16xf32>
      %257 = arith.addf %233, %256 : vector<16x16xf32>
      %c19 = arith.constant 19 : index
      %258 = memref.load %arg2[%c19] : memref<98xf32, #tpu.memory_space<smem>>
      %c68 = arith.constant 68 : index
      %259 = memref.load %arg2[%c68] : memref<98xf32, #tpu.memory_space<smem>>
      %c0_148 = arith.constant 0 : index
      %c2_149 = arith.constant 2 : index
      %c5_150 = arith.constant 5 : index
      %260 = vector.load %arg7[%c0_148, %c2_149, %c5_150] : memref<2x22x22xf32, #tpu.memory_space<vmem>>, vector<1x16x16xf32>
      %261 = vector.shape_cast %260 : vector<1x16x16xf32> to vector<16x16xf32>
      %262 = vector.broadcast %258 : f32 to vector<16x16xf32>
      %263 = arith.mulf %262, %261 : vector<16x16xf32>
      %264 = arith.addf %240, %263 : vector<16x16xf32>
      %c1_151 = arith.constant 1 : index
      %c2_152 = arith.constant 2 : index
      %c5_153 = arith.constant 5 : index
      %265 = vector.load %arg7[%c1_151, %c2_152, %c5_153] : memref<2x22x22xf32, #tpu.memory_space<vmem>>, vector<1x16x16xf32>
      %266 = vector.shape_cast %265 : vector<1x16x16xf32> to vector<16x16xf32>
      %267 = vector.broadcast %259 : f32 to vector<16x16xf32>
      %268 = arith.mulf %267, %266 : vector<16x16xf32>
      %269 = arith.addf %245, %268 : vector<16x16xf32>
      %c20 = arith.constant 20 : index
      %270 = memref.load %arg2[%c20] : memref<98xf32, #tpu.memory_space<smem>>
      %c69 = arith.constant 69 : index
      %271 = memref.load %arg2[%c69] : memref<98xf32, #tpu.memory_space<smem>>
      %c0_154 = arith.constant 0 : index
      %c2_155 = arith.constant 2 : index
      %c6_156 = arith.constant 6 : index
      %272 = vector.load %arg7[%c0_154, %c2_155, %c6_156] : memref<2x22x22xf32, #tpu.memory_space<vmem>>, vector<1x16x16xf32>
      %273 = vector.shape_cast %272 : vector<1x16x16xf32> to vector<16x16xf32>
      %274 = vector.broadcast %270 : f32 to vector<16x16xf32>
      %275 = arith.mulf %274, %273 : vector<16x16xf32>
      %276 = arith.addf %252, %275 : vector<16x16xf32>
      %c1_157 = arith.constant 1 : index
      %c2_158 = arith.constant 2 : index
      %c6_159 = arith.constant 6 : index
      %277 = vector.load %arg7[%c1_157, %c2_158, %c6_159] : memref<2x22x22xf32, #tpu.memory_space<vmem>>, vector<1x16x16xf32>
      %278 = vector.shape_cast %277 : vector<1x16x16xf32> to vector<16x16xf32>
      %279 = vector.broadcast %271 : f32 to vector<16x16xf32>
      %280 = arith.mulf %279, %278 : vector<16x16xf32>
      %281 = arith.addf %257, %280 : vector<16x16xf32>
      %c21 = arith.constant 21 : index
      %282 = memref.load %arg2[%c21] : memref<98xf32, #tpu.memory_space<smem>>
      %c70 = arith.constant 70 : index
      %283 = memref.load %arg2[%c70] : memref<98xf32, #tpu.memory_space<smem>>
      %c0_160 = arith.constant 0 : index
      %c3_161 = arith.constant 3 : index
      %c0_162 = arith.constant 0 : index
      %284 = vector.load %arg7[%c0_160, %c3_161, %c0_162] : memref<2x22x22xf32, #tpu.memory_space<vmem>>, vector<1x16x16xf32>
      %285 = vector.shape_cast %284 : vector<1x16x16xf32> to vector<16x16xf32>
      %286 = vector.broadcast %282 : f32 to vector<16x16xf32>
      %287 = arith.mulf %286, %285 : vector<16x16xf32>
      %288 = arith.addf %264, %287 : vector<16x16xf32>
      %c1_163 = arith.constant 1 : index
      %c3_164 = arith.constant 3 : index
      %c0_165 = arith.constant 0 : index
      %289 = vector.load %arg7[%c1_163, %c3_164, %c0_165] : memref<2x22x22xf32, #tpu.memory_space<vmem>>, vector<1x16x16xf32>
      %290 = vector.shape_cast %289 : vector<1x16x16xf32> to vector<16x16xf32>
      %291 = vector.broadcast %283 : f32 to vector<16x16xf32>
      %292 = arith.mulf %291, %290 : vector<16x16xf32>
      %293 = arith.addf %269, %292 : vector<16x16xf32>
      %c22 = arith.constant 22 : index
      %294 = memref.load %arg2[%c22] : memref<98xf32, #tpu.memory_space<smem>>
      %c71 = arith.constant 71 : index
      %295 = memref.load %arg2[%c71] : memref<98xf32, #tpu.memory_space<smem>>
      %c0_166 = arith.constant 0 : index
      %c3_167 = arith.constant 3 : index
      %c1_168 = arith.constant 1 : index
      %296 = vector.load %arg7[%c0_166, %c3_167, %c1_168] : memref<2x22x22xf32, #tpu.memory_space<vmem>>, vector<1x16x16xf32>
      %297 = vector.shape_cast %296 : vector<1x16x16xf32> to vector<16x16xf32>
      %298 = vector.broadcast %294 : f32 to vector<16x16xf32>
      %299 = arith.mulf %298, %297 : vector<16x16xf32>
      %300 = arith.addf %276, %299 : vector<16x16xf32>
      %c1_169 = arith.constant 1 : index
      %c3_170 = arith.constant 3 : index
      %c1_171 = arith.constant 1 : index
      %301 = vector.load %arg7[%c1_169, %c3_170, %c1_171] : memref<2x22x22xf32, #tpu.memory_space<vmem>>, vector<1x16x16xf32>
      %302 = vector.shape_cast %301 : vector<1x16x16xf32> to vector<16x16xf32>
      %303 = vector.broadcast %295 : f32 to vector<16x16xf32>
      %304 = arith.mulf %303, %302 : vector<16x16xf32>
      %305 = arith.addf %281, %304 : vector<16x16xf32>
      %c23 = arith.constant 23 : index
      %306 = memref.load %arg2[%c23] : memref<98xf32, #tpu.memory_space<smem>>
      %c72 = arith.constant 72 : index
      %307 = memref.load %arg2[%c72] : memref<98xf32, #tpu.memory_space<smem>>
      %c0_172 = arith.constant 0 : index
      %c3_173 = arith.constant 3 : index
      %c2_174 = arith.constant 2 : index
      %308 = vector.load %arg7[%c0_172, %c3_173, %c2_174] : memref<2x22x22xf32, #tpu.memory_space<vmem>>, vector<1x16x16xf32>
      %309 = vector.shape_cast %308 : vector<1x16x16xf32> to vector<16x16xf32>
      %310 = vector.broadcast %306 : f32 to vector<16x16xf32>
      %311 = arith.mulf %310, %309 : vector<16x16xf32>
      %312 = arith.addf %288, %311 : vector<16x16xf32>
      %c1_175 = arith.constant 1 : index
      %c3_176 = arith.constant 3 : index
      %c2_177 = arith.constant 2 : index
      %313 = vector.load %arg7[%c1_175, %c3_176, %c2_177] : memref<2x22x22xf32, #tpu.memory_space<vmem>>, vector<1x16x16xf32>
      %314 = vector.shape_cast %313 : vector<1x16x16xf32> to vector<16x16xf32>
      %315 = vector.broadcast %307 : f32 to vector<16x16xf32>
      %316 = arith.mulf %315, %314 : vector<16x16xf32>
      %317 = arith.addf %293, %316 : vector<16x16xf32>
      %c24 = arith.constant 24 : index
      %318 = memref.load %arg2[%c24] : memref<98xf32, #tpu.memory_space<smem>>
      %c73 = arith.constant 73 : index
      %319 = memref.load %arg2[%c73] : memref<98xf32, #tpu.memory_space<smem>>
      %c0_178 = arith.constant 0 : index
      %c3_179 = arith.constant 3 : index
      %c3_180 = arith.constant 3 : index
      %320 = vector.load %arg7[%c0_178, %c3_179, %c3_180] : memref<2x22x22xf32, #tpu.memory_space<vmem>>, vector<1x16x16xf32>
      %321 = vector.shape_cast %320 : vector<1x16x16xf32> to vector<16x16xf32>
      %322 = vector.broadcast %318 : f32 to vector<16x16xf32>
      %323 = arith.mulf %322, %321 : vector<16x16xf32>
      %324 = arith.addf %300, %323 : vector<16x16xf32>
      %c1_181 = arith.constant 1 : index
      %c3_182 = arith.constant 3 : index
      %c3_183 = arith.constant 3 : index
      %325 = vector.load %arg7[%c1_181, %c3_182, %c3_183] : memref<2x22x22xf32, #tpu.memory_space<vmem>>, vector<1x16x16xf32>
      %326 = vector.shape_cast %325 : vector<1x16x16xf32> to vector<16x16xf32>
      %327 = vector.broadcast %319 : f32 to vector<16x16xf32>
      %328 = arith.mulf %327, %326 : vector<16x16xf32>
      %329 = arith.addf %305, %328 : vector<16x16xf32>
      %c25 = arith.constant 25 : index
      %330 = memref.load %arg2[%c25] : memref<98xf32, #tpu.memory_space<smem>>
      %c74 = arith.constant 74 : index
      %331 = memref.load %arg2[%c74] : memref<98xf32, #tpu.memory_space<smem>>
      %c0_184 = arith.constant 0 : index
      %c3_185 = arith.constant 3 : index
      %c4_186 = arith.constant 4 : index
      %332 = vector.load %arg7[%c0_184, %c3_185, %c4_186] : memref<2x22x22xf32, #tpu.memory_space<vmem>>, vector<1x16x16xf32>
      %333 = vector.shape_cast %332 : vector<1x16x16xf32> to vector<16x16xf32>
      %334 = vector.broadcast %330 : f32 to vector<16x16xf32>
      %335 = arith.mulf %334, %333 : vector<16x16xf32>
      %336 = arith.addf %312, %335 : vector<16x16xf32>
      %c1_187 = arith.constant 1 : index
      %c3_188 = arith.constant 3 : index
      %c4_189 = arith.constant 4 : index
      %337 = vector.load %arg7[%c1_187, %c3_188, %c4_189] : memref<2x22x22xf32, #tpu.memory_space<vmem>>, vector<1x16x16xf32>
      %338 = vector.shape_cast %337 : vector<1x16x16xf32> to vector<16x16xf32>
      %339 = vector.broadcast %331 : f32 to vector<16x16xf32>
      %340 = arith.mulf %339, %338 : vector<16x16xf32>
      %341 = arith.addf %317, %340 : vector<16x16xf32>
      %c26 = arith.constant 26 : index
      %342 = memref.load %arg2[%c26] : memref<98xf32, #tpu.memory_space<smem>>
      %c75 = arith.constant 75 : index
      %343 = memref.load %arg2[%c75] : memref<98xf32, #tpu.memory_space<smem>>
      %c0_190 = arith.constant 0 : index
      %c3_191 = arith.constant 3 : index
      %c5_192 = arith.constant 5 : index
      %344 = vector.load %arg7[%c0_190, %c3_191, %c5_192] : memref<2x22x22xf32, #tpu.memory_space<vmem>>, vector<1x16x16xf32>
      %345 = vector.shape_cast %344 : vector<1x16x16xf32> to vector<16x16xf32>
      %346 = vector.broadcast %342 : f32 to vector<16x16xf32>
      %347 = arith.mulf %346, %345 : vector<16x16xf32>
      %348 = arith.addf %324, %347 : vector<16x16xf32>
      %c1_193 = arith.constant 1 : index
      %c3_194 = arith.constant 3 : index
      %c5_195 = arith.constant 5 : index
      %349 = vector.load %arg7[%c1_193, %c3_194, %c5_195] : memref<2x22x22xf32, #tpu.memory_space<vmem>>, vector<1x16x16xf32>
      %350 = vector.shape_cast %349 : vector<1x16x16xf32> to vector<16x16xf32>
      %351 = vector.broadcast %343 : f32 to vector<16x16xf32>
      %352 = arith.mulf %351, %350 : vector<16x16xf32>
      %353 = arith.addf %329, %352 : vector<16x16xf32>
      %c27 = arith.constant 27 : index
      %354 = memref.load %arg2[%c27] : memref<98xf32, #tpu.memory_space<smem>>
      %c76 = arith.constant 76 : index
      %355 = memref.load %arg2[%c76] : memref<98xf32, #tpu.memory_space<smem>>
      %c0_196 = arith.constant 0 : index
      %c3_197 = arith.constant 3 : index
      %c6_198 = arith.constant 6 : index
      %356 = vector.load %arg7[%c0_196, %c3_197, %c6_198] : memref<2x22x22xf32, #tpu.memory_space<vmem>>, vector<1x16x16xf32>
      %357 = vector.shape_cast %356 : vector<1x16x16xf32> to vector<16x16xf32>
      %358 = vector.broadcast %354 : f32 to vector<16x16xf32>
      %359 = arith.mulf %358, %357 : vector<16x16xf32>
      %360 = arith.addf %336, %359 : vector<16x16xf32>
      %c1_199 = arith.constant 1 : index
      %c3_200 = arith.constant 3 : index
      %c6_201 = arith.constant 6 : index
      %361 = vector.load %arg7[%c1_199, %c3_200, %c6_201] : memref<2x22x22xf32, #tpu.memory_space<vmem>>, vector<1x16x16xf32>
      %362 = vector.shape_cast %361 : vector<1x16x16xf32> to vector<16x16xf32>
      %363 = vector.broadcast %355 : f32 to vector<16x16xf32>
      %364 = arith.mulf %363, %362 : vector<16x16xf32>
      %365 = arith.addf %341, %364 : vector<16x16xf32>
      %c28 = arith.constant 28 : index
      %366 = memref.load %arg2[%c28] : memref<98xf32, #tpu.memory_space<smem>>
      %c77 = arith.constant 77 : index
      %367 = memref.load %arg2[%c77] : memref<98xf32, #tpu.memory_space<smem>>
      %c0_202 = arith.constant 0 : index
      %c4_203 = arith.constant 4 : index
      %c0_204 = arith.constant 0 : index
      %368 = vector.load %arg7[%c0_202, %c4_203, %c0_204] : memref<2x22x22xf32, #tpu.memory_space<vmem>>, vector<1x16x16xf32>
      %369 = vector.shape_cast %368 : vector<1x16x16xf32> to vector<16x16xf32>
      %370 = vector.broadcast %366 : f32 to vector<16x16xf32>
      %371 = arith.mulf %370, %369 : vector<16x16xf32>
      %372 = arith.addf %348, %371 : vector<16x16xf32>
      %c1_205 = arith.constant 1 : index
      %c4_206 = arith.constant 4 : index
      %c0_207 = arith.constant 0 : index
      %373 = vector.load %arg7[%c1_205, %c4_206, %c0_207] : memref<2x22x22xf32, #tpu.memory_space<vmem>>, vector<1x16x16xf32>
      %374 = vector.shape_cast %373 : vector<1x16x16xf32> to vector<16x16xf32>
      %375 = vector.broadcast %367 : f32 to vector<16x16xf32>
      %376 = arith.mulf %375, %374 : vector<16x16xf32>
      %377 = arith.addf %353, %376 : vector<16x16xf32>
      %c29 = arith.constant 29 : index
      %378 = memref.load %arg2[%c29] : memref<98xf32, #tpu.memory_space<smem>>
      %c78 = arith.constant 78 : index
      %379 = memref.load %arg2[%c78] : memref<98xf32, #tpu.memory_space<smem>>
      %c0_208 = arith.constant 0 : index
      %c4_209 = arith.constant 4 : index
      %c1_210 = arith.constant 1 : index
      %380 = vector.load %arg7[%c0_208, %c4_209, %c1_210] : memref<2x22x22xf32, #tpu.memory_space<vmem>>, vector<1x16x16xf32>
      %381 = vector.shape_cast %380 : vector<1x16x16xf32> to vector<16x16xf32>
      %382 = vector.broadcast %378 : f32 to vector<16x16xf32>
      %383 = arith.mulf %382, %381 : vector<16x16xf32>
      %384 = arith.addf %360, %383 : vector<16x16xf32>
      %c1_211 = arith.constant 1 : index
      %c4_212 = arith.constant 4 : index
      %c1_213 = arith.constant 1 : index
      %385 = vector.load %arg7[%c1_211, %c4_212, %c1_213] : memref<2x22x22xf32, #tpu.memory_space<vmem>>, vector<1x16x16xf32>
      %386 = vector.shape_cast %385 : vector<1x16x16xf32> to vector<16x16xf32>
      %387 = vector.broadcast %379 : f32 to vector<16x16xf32>
      %388 = arith.mulf %387, %386 : vector<16x16xf32>
      %389 = arith.addf %365, %388 : vector<16x16xf32>
      %c30 = arith.constant 30 : index
      %390 = memref.load %arg2[%c30] : memref<98xf32, #tpu.memory_space<smem>>
      %c79 = arith.constant 79 : index
      %391 = memref.load %arg2[%c79] : memref<98xf32, #tpu.memory_space<smem>>
      %c0_214 = arith.constant 0 : index
      %c4_215 = arith.constant 4 : index
      %c2_216 = arith.constant 2 : index
      %392 = vector.load %arg7[%c0_214, %c4_215, %c2_216] : memref<2x22x22xf32, #tpu.memory_space<vmem>>, vector<1x16x16xf32>
      %393 = vector.shape_cast %392 : vector<1x16x16xf32> to vector<16x16xf32>
      %394 = vector.broadcast %390 : f32 to vector<16x16xf32>
      %395 = arith.mulf %394, %393 : vector<16x16xf32>
      %396 = arith.addf %372, %395 : vector<16x16xf32>
      %c1_217 = arith.constant 1 : index
      %c4_218 = arith.constant 4 : index
      %c2_219 = arith.constant 2 : index
      %397 = vector.load %arg7[%c1_217, %c4_218, %c2_219] : memref<2x22x22xf32, #tpu.memory_space<vmem>>, vector<1x16x16xf32>
      %398 = vector.shape_cast %397 : vector<1x16x16xf32> to vector<16x16xf32>
      %399 = vector.broadcast %391 : f32 to vector<16x16xf32>
      %400 = arith.mulf %399, %398 : vector<16x16xf32>
      %401 = arith.addf %377, %400 : vector<16x16xf32>
      %c31 = arith.constant 31 : index
      %402 = memref.load %arg2[%c31] : memref<98xf32, #tpu.memory_space<smem>>
      %c80 = arith.constant 80 : index
      %403 = memref.load %arg2[%c80] : memref<98xf32, #tpu.memory_space<smem>>
      %c0_220 = arith.constant 0 : index
      %c4_221 = arith.constant 4 : index
      %c3_222 = arith.constant 3 : index
      %404 = vector.load %arg7[%c0_220, %c4_221, %c3_222] : memref<2x22x22xf32, #tpu.memory_space<vmem>>, vector<1x16x16xf32>
      %405 = vector.shape_cast %404 : vector<1x16x16xf32> to vector<16x16xf32>
      %406 = vector.broadcast %402 : f32 to vector<16x16xf32>
      %407 = arith.mulf %406, %405 : vector<16x16xf32>
      %408 = arith.addf %384, %407 : vector<16x16xf32>
      %c1_223 = arith.constant 1 : index
      %c4_224 = arith.constant 4 : index
      %c3_225 = arith.constant 3 : index
      %409 = vector.load %arg7[%c1_223, %c4_224, %c3_225] : memref<2x22x22xf32, #tpu.memory_space<vmem>>, vector<1x16x16xf32>
      %410 = vector.shape_cast %409 : vector<1x16x16xf32> to vector<16x16xf32>
      %411 = vector.broadcast %403 : f32 to vector<16x16xf32>
      %412 = arith.mulf %411, %410 : vector<16x16xf32>
      %413 = arith.addf %389, %412 : vector<16x16xf32>
      %c32 = arith.constant 32 : index
      %414 = memref.load %arg2[%c32] : memref<98xf32, #tpu.memory_space<smem>>
      %c81 = arith.constant 81 : index
      %415 = memref.load %arg2[%c81] : memref<98xf32, #tpu.memory_space<smem>>
      %c0_226 = arith.constant 0 : index
      %c4_227 = arith.constant 4 : index
      %c4_228 = arith.constant 4 : index
      %416 = vector.load %arg7[%c0_226, %c4_227, %c4_228] : memref<2x22x22xf32, #tpu.memory_space<vmem>>, vector<1x16x16xf32>
      %417 = vector.shape_cast %416 : vector<1x16x16xf32> to vector<16x16xf32>
      %418 = vector.broadcast %414 : f32 to vector<16x16xf32>
      %419 = arith.mulf %418, %417 : vector<16x16xf32>
      %420 = arith.addf %396, %419 : vector<16x16xf32>
      %c1_229 = arith.constant 1 : index
      %c4_230 = arith.constant 4 : index
      %c4_231 = arith.constant 4 : index
      %421 = vector.load %arg7[%c1_229, %c4_230, %c4_231] : memref<2x22x22xf32, #tpu.memory_space<vmem>>, vector<1x16x16xf32>
      %422 = vector.shape_cast %421 : vector<1x16x16xf32> to vector<16x16xf32>
      %423 = vector.broadcast %415 : f32 to vector<16x16xf32>
      %424 = arith.mulf %423, %422 : vector<16x16xf32>
      %425 = arith.addf %401, %424 : vector<16x16xf32>
      %c33 = arith.constant 33 : index
      %426 = memref.load %arg2[%c33] : memref<98xf32, #tpu.memory_space<smem>>
      %c82 = arith.constant 82 : index
      %427 = memref.load %arg2[%c82] : memref<98xf32, #tpu.memory_space<smem>>
      %c0_232 = arith.constant 0 : index
      %c4_233 = arith.constant 4 : index
      %c5_234 = arith.constant 5 : index
      %428 = vector.load %arg7[%c0_232, %c4_233, %c5_234] : memref<2x22x22xf32, #tpu.memory_space<vmem>>, vector<1x16x16xf32>
      %429 = vector.shape_cast %428 : vector<1x16x16xf32> to vector<16x16xf32>
      %430 = vector.broadcast %426 : f32 to vector<16x16xf32>
      %431 = arith.mulf %430, %429 : vector<16x16xf32>
      %432 = arith.addf %408, %431 : vector<16x16xf32>
      %c1_235 = arith.constant 1 : index
      %c4_236 = arith.constant 4 : index
      %c5_237 = arith.constant 5 : index
      %433 = vector.load %arg7[%c1_235, %c4_236, %c5_237] : memref<2x22x22xf32, #tpu.memory_space<vmem>>, vector<1x16x16xf32>
      %434 = vector.shape_cast %433 : vector<1x16x16xf32> to vector<16x16xf32>
      %435 = vector.broadcast %427 : f32 to vector<16x16xf32>
      %436 = arith.mulf %435, %434 : vector<16x16xf32>
      %437 = arith.addf %413, %436 : vector<16x16xf32>
      %c34 = arith.constant 34 : index
      %438 = memref.load %arg2[%c34] : memref<98xf32, #tpu.memory_space<smem>>
      %c83 = arith.constant 83 : index
      %439 = memref.load %arg2[%c83] : memref<98xf32, #tpu.memory_space<smem>>
      %c0_238 = arith.constant 0 : index
      %c4_239 = arith.constant 4 : index
      %c6_240 = arith.constant 6 : index
      %440 = vector.load %arg7[%c0_238, %c4_239, %c6_240] : memref<2x22x22xf32, #tpu.memory_space<vmem>>, vector<1x16x16xf32>
      %441 = vector.shape_cast %440 : vector<1x16x16xf32> to vector<16x16xf32>
      %442 = vector.broadcast %438 : f32 to vector<16x16xf32>
      %443 = arith.mulf %442, %441 : vector<16x16xf32>
      %444 = arith.addf %420, %443 : vector<16x16xf32>
      %c1_241 = arith.constant 1 : index
      %c4_242 = arith.constant 4 : index
      %c6_243 = arith.constant 6 : index
      %445 = vector.load %arg7[%c1_241, %c4_242, %c6_243] : memref<2x22x22xf32, #tpu.memory_space<vmem>>, vector<1x16x16xf32>
      %446 = vector.shape_cast %445 : vector<1x16x16xf32> to vector<16x16xf32>
      %447 = vector.broadcast %439 : f32 to vector<16x16xf32>
      %448 = arith.mulf %447, %446 : vector<16x16xf32>
      %449 = arith.addf %425, %448 : vector<16x16xf32>
      %c35 = arith.constant 35 : index
      %450 = memref.load %arg2[%c35] : memref<98xf32, #tpu.memory_space<smem>>
      %c84 = arith.constant 84 : index
      %451 = memref.load %arg2[%c84] : memref<98xf32, #tpu.memory_space<smem>>
      %c0_244 = arith.constant 0 : index
      %c5_245 = arith.constant 5 : index
      %c0_246 = arith.constant 0 : index
      %452 = vector.load %arg7[%c0_244, %c5_245, %c0_246] : memref<2x22x22xf32, #tpu.memory_space<vmem>>, vector<1x16x16xf32>
      %453 = vector.shape_cast %452 : vector<1x16x16xf32> to vector<16x16xf32>
      %454 = vector.broadcast %450 : f32 to vector<16x16xf32>
      %455 = arith.mulf %454, %453 : vector<16x16xf32>
      %456 = arith.addf %432, %455 : vector<16x16xf32>
      %c1_247 = arith.constant 1 : index
      %c5_248 = arith.constant 5 : index
      %c0_249 = arith.constant 0 : index
      %457 = vector.load %arg7[%c1_247, %c5_248, %c0_249] : memref<2x22x22xf32, #tpu.memory_space<vmem>>, vector<1x16x16xf32>
      %458 = vector.shape_cast %457 : vector<1x16x16xf32> to vector<16x16xf32>
      %459 = vector.broadcast %451 : f32 to vector<16x16xf32>
      %460 = arith.mulf %459, %458 : vector<16x16xf32>
      %461 = arith.addf %437, %460 : vector<16x16xf32>
      %c36 = arith.constant 36 : index
      %462 = memref.load %arg2[%c36] : memref<98xf32, #tpu.memory_space<smem>>
      %c85 = arith.constant 85 : index
      %463 = memref.load %arg2[%c85] : memref<98xf32, #tpu.memory_space<smem>>
      %c0_250 = arith.constant 0 : index
      %c5_251 = arith.constant 5 : index
      %c1_252 = arith.constant 1 : index
      %464 = vector.load %arg7[%c0_250, %c5_251, %c1_252] : memref<2x22x22xf32, #tpu.memory_space<vmem>>, vector<1x16x16xf32>
      %465 = vector.shape_cast %464 : vector<1x16x16xf32> to vector<16x16xf32>
      %466 = vector.broadcast %462 : f32 to vector<16x16xf32>
      %467 = arith.mulf %466, %465 : vector<16x16xf32>
      %468 = arith.addf %444, %467 : vector<16x16xf32>
      %c1_253 = arith.constant 1 : index
      %c5_254 = arith.constant 5 : index
      %c1_255 = arith.constant 1 : index
      %469 = vector.load %arg7[%c1_253, %c5_254, %c1_255] : memref<2x22x22xf32, #tpu.memory_space<vmem>>, vector<1x16x16xf32>
      %470 = vector.shape_cast %469 : vector<1x16x16xf32> to vector<16x16xf32>
      %471 = vector.broadcast %463 : f32 to vector<16x16xf32>
      %472 = arith.mulf %471, %470 : vector<16x16xf32>
      %473 = arith.addf %449, %472 : vector<16x16xf32>
      %c37 = arith.constant 37 : index
      %474 = memref.load %arg2[%c37] : memref<98xf32, #tpu.memory_space<smem>>
      %c86 = arith.constant 86 : index
      %475 = memref.load %arg2[%c86] : memref<98xf32, #tpu.memory_space<smem>>
      %c0_256 = arith.constant 0 : index
      %c5_257 = arith.constant 5 : index
      %c2_258 = arith.constant 2 : index
      %476 = vector.load %arg7[%c0_256, %c5_257, %c2_258] : memref<2x22x22xf32, #tpu.memory_space<vmem>>, vector<1x16x16xf32>
      %477 = vector.shape_cast %476 : vector<1x16x16xf32> to vector<16x16xf32>
      %478 = vector.broadcast %474 : f32 to vector<16x16xf32>
      %479 = arith.mulf %478, %477 : vector<16x16xf32>
      %480 = arith.addf %456, %479 : vector<16x16xf32>
      %c1_259 = arith.constant 1 : index
      %c5_260 = arith.constant 5 : index
      %c2_261 = arith.constant 2 : index
      %481 = vector.load %arg7[%c1_259, %c5_260, %c2_261] : memref<2x22x22xf32, #tpu.memory_space<vmem>>, vector<1x16x16xf32>
      %482 = vector.shape_cast %481 : vector<1x16x16xf32> to vector<16x16xf32>
      %483 = vector.broadcast %475 : f32 to vector<16x16xf32>
      %484 = arith.mulf %483, %482 : vector<16x16xf32>
      %485 = arith.addf %461, %484 : vector<16x16xf32>
      %c38 = arith.constant 38 : index
      %486 = memref.load %arg2[%c38] : memref<98xf32, #tpu.memory_space<smem>>
      %c87 = arith.constant 87 : index
      %487 = memref.load %arg2[%c87] : memref<98xf32, #tpu.memory_space<smem>>
      %c0_262 = arith.constant 0 : index
      %c5_263 = arith.constant 5 : index
      %c3_264 = arith.constant 3 : index
      %488 = vector.load %arg7[%c0_262, %c5_263, %c3_264] : memref<2x22x22xf32, #tpu.memory_space<vmem>>, vector<1x16x16xf32>
      %489 = vector.shape_cast %488 : vector<1x16x16xf32> to vector<16x16xf32>
      %490 = vector.broadcast %486 : f32 to vector<16x16xf32>
      %491 = arith.mulf %490, %489 : vector<16x16xf32>
      %492 = arith.addf %468, %491 : vector<16x16xf32>
      %c1_265 = arith.constant 1 : index
      %c5_266 = arith.constant 5 : index
      %c3_267 = arith.constant 3 : index
      %493 = vector.load %arg7[%c1_265, %c5_266, %c3_267] : memref<2x22x22xf32, #tpu.memory_space<vmem>>, vector<1x16x16xf32>
      %494 = vector.shape_cast %493 : vector<1x16x16xf32> to vector<16x16xf32>
      %495 = vector.broadcast %487 : f32 to vector<16x16xf32>
      %496 = arith.mulf %495, %494 : vector<16x16xf32>
      %497 = arith.addf %473, %496 : vector<16x16xf32>
      %c39 = arith.constant 39 : index
      %498 = memref.load %arg2[%c39] : memref<98xf32, #tpu.memory_space<smem>>
      %c88 = arith.constant 88 : index
      %499 = memref.load %arg2[%c88] : memref<98xf32, #tpu.memory_space<smem>>
      %c0_268 = arith.constant 0 : index
      %c5_269 = arith.constant 5 : index
      %c4_270 = arith.constant 4 : index
      %500 = vector.load %arg7[%c0_268, %c5_269, %c4_270] : memref<2x22x22xf32, #tpu.memory_space<vmem>>, vector<1x16x16xf32>
      %501 = vector.shape_cast %500 : vector<1x16x16xf32> to vector<16x16xf32>
      %502 = vector.broadcast %498 : f32 to vector<16x16xf32>
      %503 = arith.mulf %502, %501 : vector<16x16xf32>
      %504 = arith.addf %480, %503 : vector<16x16xf32>
      %c1_271 = arith.constant 1 : index
      %c5_272 = arith.constant 5 : index
      %c4_273 = arith.constant 4 : index
      %505 = vector.load %arg7[%c1_271, %c5_272, %c4_273] : memref<2x22x22xf32, #tpu.memory_space<vmem>>, vector<1x16x16xf32>
      %506 = vector.shape_cast %505 : vector<1x16x16xf32> to vector<16x16xf32>
      %507 = vector.broadcast %499 : f32 to vector<16x16xf32>
      %508 = arith.mulf %507, %506 : vector<16x16xf32>
      %509 = arith.addf %485, %508 : vector<16x16xf32>
      %c40 = arith.constant 40 : index
      %510 = memref.load %arg2[%c40] : memref<98xf32, #tpu.memory_space<smem>>
      %c89 = arith.constant 89 : index
      %511 = memref.load %arg2[%c89] : memref<98xf32, #tpu.memory_space<smem>>
      %c0_274 = arith.constant 0 : index
      %c5_275 = arith.constant 5 : index
      %c5_276 = arith.constant 5 : index
      %512 = vector.load %arg7[%c0_274, %c5_275, %c5_276] : memref<2x22x22xf32, #tpu.memory_space<vmem>>, vector<1x16x16xf32>
      %513 = vector.shape_cast %512 : vector<1x16x16xf32> to vector<16x16xf32>
      %514 = vector.broadcast %510 : f32 to vector<16x16xf32>
      %515 = arith.mulf %514, %513 : vector<16x16xf32>
      %516 = arith.addf %492, %515 : vector<16x16xf32>
      %c1_277 = arith.constant 1 : index
      %c5_278 = arith.constant 5 : index
      %c5_279 = arith.constant 5 : index
      %517 = vector.load %arg7[%c1_277, %c5_278, %c5_279] : memref<2x22x22xf32, #tpu.memory_space<vmem>>, vector<1x16x16xf32>
      %518 = vector.shape_cast %517 : vector<1x16x16xf32> to vector<16x16xf32>
      %519 = vector.broadcast %511 : f32 to vector<16x16xf32>
      %520 = arith.mulf %519, %518 : vector<16x16xf32>
      %521 = arith.addf %497, %520 : vector<16x16xf32>
      %c41 = arith.constant 41 : index
      %522 = memref.load %arg2[%c41] : memref<98xf32, #tpu.memory_space<smem>>
      %c90 = arith.constant 90 : index
      %523 = memref.load %arg2[%c90] : memref<98xf32, #tpu.memory_space<smem>>
      %c0_280 = arith.constant 0 : index
      %c5_281 = arith.constant 5 : index
      %c6_282 = arith.constant 6 : index
      %524 = vector.load %arg7[%c0_280, %c5_281, %c6_282] : memref<2x22x22xf32, #tpu.memory_space<vmem>>, vector<1x16x16xf32>
      %525 = vector.shape_cast %524 : vector<1x16x16xf32> to vector<16x16xf32>
      %526 = vector.broadcast %522 : f32 to vector<16x16xf32>
      %527 = arith.mulf %526, %525 : vector<16x16xf32>
      %528 = arith.addf %504, %527 : vector<16x16xf32>
      %c1_283 = arith.constant 1 : index
      %c5_284 = arith.constant 5 : index
      %c6_285 = arith.constant 6 : index
      %529 = vector.load %arg7[%c1_283, %c5_284, %c6_285] : memref<2x22x22xf32, #tpu.memory_space<vmem>>, vector<1x16x16xf32>
      %530 = vector.shape_cast %529 : vector<1x16x16xf32> to vector<16x16xf32>
      %531 = vector.broadcast %523 : f32 to vector<16x16xf32>
      %532 = arith.mulf %531, %530 : vector<16x16xf32>
      %533 = arith.addf %509, %532 : vector<16x16xf32>
      %c42 = arith.constant 42 : index
      %534 = memref.load %arg2[%c42] : memref<98xf32, #tpu.memory_space<smem>>
      %c91 = arith.constant 91 : index
      %535 = memref.load %arg2[%c91] : memref<98xf32, #tpu.memory_space<smem>>
      %c0_286 = arith.constant 0 : index
      %c6_287 = arith.constant 6 : index
      %c0_288 = arith.constant 0 : index
      %536 = vector.load %arg7[%c0_286, %c6_287, %c0_288] : memref<2x22x22xf32, #tpu.memory_space<vmem>>, vector<1x16x16xf32>
      %537 = vector.shape_cast %536 : vector<1x16x16xf32> to vector<16x16xf32>
      %538 = vector.broadcast %534 : f32 to vector<16x16xf32>
      %539 = arith.mulf %538, %537 : vector<16x16xf32>
      %540 = arith.addf %516, %539 : vector<16x16xf32>
      %c1_289 = arith.constant 1 : index
      %c6_290 = arith.constant 6 : index
      %c0_291 = arith.constant 0 : index
      %541 = vector.load %arg7[%c1_289, %c6_290, %c0_291] : memref<2x22x22xf32, #tpu.memory_space<vmem>>, vector<1x16x16xf32>
      %542 = vector.shape_cast %541 : vector<1x16x16xf32> to vector<16x16xf32>
      %543 = vector.broadcast %535 : f32 to vector<16x16xf32>
      %544 = arith.mulf %543, %542 : vector<16x16xf32>
      %545 = arith.addf %521, %544 : vector<16x16xf32>
      %c43 = arith.constant 43 : index
      %546 = memref.load %arg2[%c43] : memref<98xf32, #tpu.memory_space<smem>>
      %c92 = arith.constant 92 : index
      %547 = memref.load %arg2[%c92] : memref<98xf32, #tpu.memory_space<smem>>
      %c0_292 = arith.constant 0 : index
      %c6_293 = arith.constant 6 : index
      %c1_294 = arith.constant 1 : index
      %548 = vector.load %arg7[%c0_292, %c6_293, %c1_294] : memref<2x22x22xf32, #tpu.memory_space<vmem>>, vector<1x16x16xf32>
      %549 = vector.shape_cast %548 : vector<1x16x16xf32> to vector<16x16xf32>
      %550 = vector.broadcast %546 : f32 to vector<16x16xf32>
      %551 = arith.mulf %550, %549 : vector<16x16xf32>
      %552 = arith.addf %528, %551 : vector<16x16xf32>
      %c1_295 = arith.constant 1 : index
      %c6_296 = arith.constant 6 : index
      %c1_297 = arith.constant 1 : index
      %553 = vector.load %arg7[%c1_295, %c6_296, %c1_297] : memref<2x22x22xf32, #tpu.memory_space<vmem>>, vector<1x16x16xf32>
      %554 = vector.shape_cast %553 : vector<1x16x16xf32> to vector<16x16xf32>
      %555 = vector.broadcast %547 : f32 to vector<16x16xf32>
      %556 = arith.mulf %555, %554 : vector<16x16xf32>
      %557 = arith.addf %533, %556 : vector<16x16xf32>
      %c44 = arith.constant 44 : index
      %558 = memref.load %arg2[%c44] : memref<98xf32, #tpu.memory_space<smem>>
      %c93 = arith.constant 93 : index
      %559 = memref.load %arg2[%c93] : memref<98xf32, #tpu.memory_space<smem>>
      %c0_298 = arith.constant 0 : index
      %c6_299 = arith.constant 6 : index
      %c2_300 = arith.constant 2 : index
      %560 = vector.load %arg7[%c0_298, %c6_299, %c2_300] : memref<2x22x22xf32, #tpu.memory_space<vmem>>, vector<1x16x16xf32>
      %561 = vector.shape_cast %560 : vector<1x16x16xf32> to vector<16x16xf32>
      %562 = vector.broadcast %558 : f32 to vector<16x16xf32>
      %563 = arith.mulf %562, %561 : vector<16x16xf32>
      %564 = arith.addf %540, %563 : vector<16x16xf32>
      %c1_301 = arith.constant 1 : index
      %c6_302 = arith.constant 6 : index
      %c2_303 = arith.constant 2 : index
      %565 = vector.load %arg7[%c1_301, %c6_302, %c2_303] : memref<2x22x22xf32, #tpu.memory_space<vmem>>, vector<1x16x16xf32>
      %566 = vector.shape_cast %565 : vector<1x16x16xf32> to vector<16x16xf32>
      %567 = vector.broadcast %559 : f32 to vector<16x16xf32>
      %568 = arith.mulf %567, %566 : vector<16x16xf32>
      %569 = arith.addf %545, %568 : vector<16x16xf32>
      %c45 = arith.constant 45 : index
      %570 = memref.load %arg2[%c45] : memref<98xf32, #tpu.memory_space<smem>>
      %c94 = arith.constant 94 : index
      %571 = memref.load %arg2[%c94] : memref<98xf32, #tpu.memory_space<smem>>
      %c0_304 = arith.constant 0 : index
      %c6_305 = arith.constant 6 : index
      %c3_306 = arith.constant 3 : index
      %572 = vector.load %arg7[%c0_304, %c6_305, %c3_306] : memref<2x22x22xf32, #tpu.memory_space<vmem>>, vector<1x16x16xf32>
      %573 = vector.shape_cast %572 : vector<1x16x16xf32> to vector<16x16xf32>
      %574 = vector.broadcast %570 : f32 to vector<16x16xf32>
      %575 = arith.mulf %574, %573 : vector<16x16xf32>
      %576 = arith.addf %552, %575 : vector<16x16xf32>
      %c1_307 = arith.constant 1 : index
      %c6_308 = arith.constant 6 : index
      %c3_309 = arith.constant 3 : index
      %577 = vector.load %arg7[%c1_307, %c6_308, %c3_309] : memref<2x22x22xf32, #tpu.memory_space<vmem>>, vector<1x16x16xf32>
      %578 = vector.shape_cast %577 : vector<1x16x16xf32> to vector<16x16xf32>
      %579 = vector.broadcast %571 : f32 to vector<16x16xf32>
      %580 = arith.mulf %579, %578 : vector<16x16xf32>
      %581 = arith.addf %557, %580 : vector<16x16xf32>
      %c46 = arith.constant 46 : index
      %582 = memref.load %arg2[%c46] : memref<98xf32, #tpu.memory_space<smem>>
      %c95 = arith.constant 95 : index
      %583 = memref.load %arg2[%c95] : memref<98xf32, #tpu.memory_space<smem>>
      %c0_310 = arith.constant 0 : index
      %c6_311 = arith.constant 6 : index
      %c4_312 = arith.constant 4 : index
      %584 = vector.load %arg7[%c0_310, %c6_311, %c4_312] : memref<2x22x22xf32, #tpu.memory_space<vmem>>, vector<1x16x16xf32>
      %585 = vector.shape_cast %584 : vector<1x16x16xf32> to vector<16x16xf32>
      %586 = vector.broadcast %582 : f32 to vector<16x16xf32>
      %587 = arith.mulf %586, %585 : vector<16x16xf32>
      %588 = arith.addf %564, %587 : vector<16x16xf32>
      %c1_313 = arith.constant 1 : index
      %c6_314 = arith.constant 6 : index
      %c4_315 = arith.constant 4 : index
      %589 = vector.load %arg7[%c1_313, %c6_314, %c4_315] : memref<2x22x22xf32, #tpu.memory_space<vmem>>, vector<1x16x16xf32>
      %590 = vector.shape_cast %589 : vector<1x16x16xf32> to vector<16x16xf32>
      %591 = vector.broadcast %583 : f32 to vector<16x16xf32>
      %592 = arith.mulf %591, %590 : vector<16x16xf32>
      %593 = arith.addf %569, %592 : vector<16x16xf32>
      %c47 = arith.constant 47 : index
      %594 = memref.load %arg2[%c47] : memref<98xf32, #tpu.memory_space<smem>>
      %c96 = arith.constant 96 : index
      %595 = memref.load %arg2[%c96] : memref<98xf32, #tpu.memory_space<smem>>
      %c0_316 = arith.constant 0 : index
      %c6_317 = arith.constant 6 : index
      %c5_318 = arith.constant 5 : index
      %596 = vector.load %arg7[%c0_316, %c6_317, %c5_318] : memref<2x22x22xf32, #tpu.memory_space<vmem>>, vector<1x16x16xf32>
      %597 = vector.shape_cast %596 : vector<1x16x16xf32> to vector<16x16xf32>
      %598 = vector.broadcast %594 : f32 to vector<16x16xf32>
      %599 = arith.mulf %598, %597 : vector<16x16xf32>
      %600 = arith.addf %576, %599 : vector<16x16xf32>
      %c1_319 = arith.constant 1 : index
      %c6_320 = arith.constant 6 : index
      %c5_321 = arith.constant 5 : index
      %601 = vector.load %arg7[%c1_319, %c6_320, %c5_321] : memref<2x22x22xf32, #tpu.memory_space<vmem>>, vector<1x16x16xf32>
      %602 = vector.shape_cast %601 : vector<1x16x16xf32> to vector<16x16xf32>
      %603 = vector.broadcast %595 : f32 to vector<16x16xf32>
      %604 = arith.mulf %603, %602 : vector<16x16xf32>
      %605 = arith.addf %581, %604 : vector<16x16xf32>
      %c48 = arith.constant 48 : index
      %606 = memref.load %arg2[%c48] : memref<98xf32, #tpu.memory_space<smem>>
      %c97 = arith.constant 97 : index
      %607 = memref.load %arg2[%c97] : memref<98xf32, #tpu.memory_space<smem>>
      %c0_322 = arith.constant 0 : index
      %c6_323 = arith.constant 6 : index
      %c6_324 = arith.constant 6 : index
      %608 = vector.load %arg7[%c0_322, %c6_323, %c6_324] : memref<2x22x22xf32, #tpu.memory_space<vmem>>, vector<1x16x16xf32>
      %609 = vector.shape_cast %608 : vector<1x16x16xf32> to vector<16x16xf32>
      %610 = vector.broadcast %606 : f32 to vector<16x16xf32>
      %611 = arith.mulf %610, %609 : vector<16x16xf32>
      %612 = arith.addf %588, %611 : vector<16x16xf32>
      %c1_325 = arith.constant 1 : index
      %c6_326 = arith.constant 6 : index
      %c6_327 = arith.constant 6 : index
      %613 = vector.load %arg7[%c1_325, %c6_326, %c6_327] : memref<2x22x22xf32, #tpu.memory_space<vmem>>, vector<1x16x16xf32>
      %614 = vector.shape_cast %613 : vector<1x16x16xf32> to vector<16x16xf32>
      %615 = vector.broadcast %607 : f32 to vector<16x16xf32>
      %616 = arith.mulf %615, %614 : vector<16x16xf32>
      %617 = arith.addf %593, %616 : vector<16x16xf32>
      %618 = arith.addf %612, %600 : vector<16x16xf32>
      %619 = arith.addf %617, %605 : vector<16x16xf32>
      %620 = arith.addf %618, %619 : vector<16x16xf32>
      %621 = arith.negf %620 : vector<16x16xf32>
      %622 = math.exp %621 : vector<16x16xf32>
      %cst_328 = arith.constant 1.000000e+00 : f32
      %623 = vector.broadcast %cst_328 : f32 to vector<16x16xf32>
      %624 = arith.addf %623, %622 : vector<16x16xf32>
      %625 = arith.divf %623, %624 : vector<16x16xf32>
      %c0_329 = arith.constant 0 : index
      %c0_330 = arith.constant 0 : index
      %c0_331 = arith.constant 0 : index
      %c0_332 = arith.constant 0 : index
      %626 = vector.load %arg4[%c0_329, %c0_330, %c0_331, %c0_332] : memref<1x1x16x16xf32, #tpu.memory_space<vmem>>, vector<1x1x16x16xf32>
      %627 = vector.shape_cast %626 : vector<1x1x16x16xf32> to vector<16x16xf32>
      %628 = vector.shape_cast %625 : vector<16x16xf32> to vector<1x1x16x16xf32>
      tpu.vector_store %arg4[%c0_329, %c0_330, %c0_331, %c0_332], %628 {strides = array<i32>} : memref<1x1x16x16xf32, #tpu.memory_space<vmem>>, vector<1x1x16x16xf32>,
    } else {
    }
    return
  }
  func.func @transform_0(%arg0: i32, %arg1: i32) -> i32 {
    %c0_i32 = arith.constant 0 : i32
    %c0_i32_0 = arith.constant 0 : i32
    return %c0_i32 : i32
  }
  func.func @transform_1(%arg0: i32, %arg1: i32) -> (i32, i32, i32, i32) {
    %c0_i32 = arith.constant 0 : i32
    %c0_i32_0 = arith.constant 0 : i32
    %c0_i32_1 = arith.constant 0 : i32
    return %arg0, %arg1, %c0_i32, %c0_i32_0 : i32, i32, i32, i32
  }
  func.func @transform_2(%arg0: i32, %arg1: i32) -> (i32, i32, i32, i32) {
    %c0_i32 = arith.constant 0 : i32
    %c0_i32_0 = arith.constant 0 : i32
    %c0_i32_1 = arith.constant 0 : i32
    %c0_i32_2 = arith.constant 0 : i32
    return %arg0, %c0_i32, %c0_i32_0, %c0_i32_1 : i32, i32, i32, i32
  }
}

</mosaic_0001>

<llo_original>
// kernel: tpu_custom_call.1
$region0: #{tpu_custom_call.1}
  #allocation0 [shape = 'u32[]', space=smem, size = 0x4, offset = 0x4, fixed_abs, tag = 'smem constant byte address 0x4 - core index']
  #allocation1 [shape = 'u32[72,128]{1,0:T(1,128)}', space=vmem, size = 0x9000, scoped, tag = 'internal scratch']
  #allocation2 [shape = 'f32[16,16]{1,0:T(8,128)}', space=vmem, size = 0x2000, scoped, tag = 'scratch operand']
  #allocation3 [shape = 'f32[16,16]{1,0:T(8,128)}', space=vmem, size = 0x2000, scoped, tag = 'scratch operand']
  #allocation4 [shape = 'f32[2,22,22]{2,1,0:T(8,128)}', space=vmem, size = 0x6000, scoped, tag = 'scratch operand']
  %s0 = inlined_call_operand.hbm [shape: f32[98], index: 0, kind: input, shape index: {}]
  %s1 = inlined_call_operand.hbm [shape: f32[2,4,16,16], index: 1, kind: input, shape index: {}]
  %s2 = inlined_call_operand.hbm [shape: f32[2,1,16,16], index: 2, kind: output, shape index: {}]
  %s3 = sld [smem:[#allocation0]]
  $region57: #{tpu_custom_call.1} parent=0
    _
  %s5 = ssub.s32 1, %s3
  %s6 = scalar_select 0, %s5, %s3
  $region1: #{tpu_custom_call.1} parent=0
    #allocation5 [shape = 'u8[512]{0}', space=smem, size = 0x200, scoped, tag = 'input window, operand 0, single buffered']
    #allocation6 [shape = 's32[2]{0}', space=sflag, size = 0x8, scoped, tag = 'scoped memory for tpu_custom_call.1']
    #allocation7 [shape = 's32[2]{0}', space=sflag, size = 0x8, scoped, tag = 'scoped memory for tpu_custom_call.1']
    #allocation8 [shape = 's32[2]{0}', space=sflag, size = 0x8, scoped, tag = 'scoped memory for tpu_custom_call.1']
    #allocation9 [shape = 'u8[65536]{0}', space=vmem, size = 0x10000, scoped, tag = 'input window, operand 1']
    #allocation10 [shape = 'u8[16384]{0}', space=vmem, size = 0x4000, scoped, tag = 'output window, operand 0']
    %7 = vsyncpa [#allocation8], 0
    %8 = vsyncpa [#allocation6], 0
    %s9 = scalar_lea.sflag [#allocation6], 1
    %10 = vsyncpa %s9, 0
    %11 = vsyncpa [#allocation7], 0
    %s12 = scalar_lea.sflag [#allocation7], 1
    %13 = vsyncpa %s12, 0
    loop: start=0, step=1, limit=4
    $region2: #{tpu_custom_call.1} parent=1 // loop_pre_header
      _
    $region3: #{tpu_custom_call.1} parent=1 // loop_header
      %s15 = sphi 0, %s19
      %p16 = scmp.ge.s32.totalorder %s15, 4
      %s22 = sphi 0, %s34
      %s23 = sphi 0, %s30
      %s24 = sphi 0, %s22
      %s25 = sphi 0, %s23
      %s26 = sphi 0, %s24
      %s27 = sphi 0, %s25
      %s35 = sphi 0, %s35
      %s37 = sphi 0, %s35
      %s38 = sphi 0, %s37
      %s52 = sphi 0, %s38
      %s60 = sphi 0, %s62
      %s63 = sphi 0, %s60
      %s64 = sphi 0, %s63
      %s80 = sphi 0, %s64
      %s86 = sphi 0, %s88
      %s89 = sphi 0, %s86
      %s90 = sphi 0, %s89
      %s106 = sphi 0, %s90
    $region4: #{tpu_custom_call.1} parent=1 // loop_header_branch
      %18 = sbr.rel (%p16) target = $region8
    $region5: #{tpu_custom_call.1} parent=1 // loop_body
      %s20 = ssub.s32 %s15, 1
      %s21 = ssub.s32 %s15, 2
      %s28 = sadd.s32 1, %s23
      %p29 = scmp.ge.s32.totalorder %s28, 1
      %s30 = scalar_select %p29, 0, %s28
      %s31 = sadd.s32 1, %s22
      %s32 = scalar_select %p29, %s31, %s22
      %p33 = scmp.ge.s32.totalorder %s32, 2
      %s34 = scalar_select %p33, 0, %s32
      %s36 = sadd.s32 %s35, 1
      %p39 = scmp.eq.s32.totalorder %s15, 1
      %p40 = scmp.ne.s32.totalorder %s35, %s37
      %p41 = scmp.eq.s32.totalorder %s15, 0
      %p42 = por %p40, %p41
      %p43 = scmp.ne.s32.totalorder %s35, %s37
      %p44 = scmp.eq.s32.totalorder %s20, 1
      %p45 = por %p43, %p44
      %p46 = scmp.ne.s32.totalorder %s37, %s38
      %p47 = scmp.eq.s32.totalorder %s20, 0
      %p48 = por %p46, %p47
      %p49 = scmp.ne.s32.totalorder %s37, %s38
      %p50 = scmp.eq.s32.totalorder %s21, 1
      %p51 = por %p49, %p50
      %p53 = scmp.ne.s32.totalorder %s38, %s52
      %p54 = scmp.eq.s32.totalorder %s21, 0
      %p55 = por %p53, %p54
      %s56 = ssub.s32 %s22, %s34
      %s57 = ssub.s32 %s23, %s30
      %s58 = sor.u32 %s56, %s57
      %p59 = scmp.eq.s32.totalorder %s58, 0
      %s61 = sadd.s32 %s60, 1
      %s62 = scalar_select %p59, %s60, %s61
      %p65 = pneg %p59
      %p66 = scmp.eq.s32.totalorder %s15, 1
      %p67 = por %p65, %p66
      %p68 = scmp.ne.s32.totalorder %s60, %s63
      %p69 = scmp.eq.s32.totalorder %s15, 0
      %p70 = por %p68, %p69
      %p71 = scmp.ne.s32.totalorder %s60, %s63
      %p72 = scmp.eq.s32.totalorder %s20, 1
      %p73 = por %p71, %p72
      %p74 = scmp.ne.s32.totalorder %s63, %s64
      %p75 = scmp.eq.s32.totalorder %s20, 0
      %p76 = por %p74, %p75
      %p77 = scmp.ne.s32.totalorder %s63, %s64
      %p78 = scmp.eq.s32.totalorder %s21, 1
      %p79 = por %p77, %p78
      %p81 = scmp.ne.s32.totalorder %s64, %s80
      %p82 = scmp.eq.s32.totalorder %s21, 0
      %p83 = por %p81, %p82
      %s84 = ssub.s32 %s22, %s34
      %p85 = scmp.eq.s32.totalorder %s84, 0
      %s87 = sadd.s32 %s86, 1
      %s88 = scalar_select %p85, %s86, %s87
      %p91 = pneg %p85
      %p92 = scmp.eq.s32.totalorder %s15, 1
      %p93 = por %p91, %p92
      %p94 = scmp.ne.s32.totalorder %s86, %s89
      %p95 = scmp.eq.s32.totalorder %s15, 0
      %p96 = por %p94, %p95
      %p97 = scmp.ne.s32.totalorder %s86, %s89
      %p98 = scmp.eq.s32.totalorder %s20, 1
      %p99 = por %p97, %p98
      %p100 = scmp.ne.s32.totalorder %s89, %s90
      %p101 = scmp.eq.s32.totalorder %s20, 0
      %p102 = por %p100, %p101
      %p103 = scmp.ne.s32.totalorder %s89, %s90
      %p104 = scmp.eq.s32.totalorder %s21, 1
      %p105 = por %p103, %p104
      %p107 = scmp.ne.s32.totalorder %s90, %s106
      %p108 = scmp.eq.s32.totalorder %s21, 0
      %p109 = por %p107, %p108
      %p110 = scmp.le.s32.totalorder 1, %s15
      %p111 = scmp.lt.s32.totalorder %s15, 3
      %p112 = pnand %p110, %p111
      %p113 = pneg %p112
      // Predicated region
      $region9: #{tpu_custom_call.1} parent=5 // pred_check
        _
      $region10: #{tpu_custom_call.1} parent=5 // pred_check_branch
        %115 = sbr.rel (%p112) target = $region12
      $region11: #{tpu_custom_call.1} parent=5 // pred_region
        %s116 = ssub.s32 %s15, 1
        // Predicated region
        $region13: #{tpu_custom_call.1} parent=11 // pred_check
          %p117 = pneg %p48
        $region14: #{tpu_custom_call.1} parent=11 // pred_check_branch
          %119 = sbr.rel (%p117) target = $region16
        $region15: #{tpu_custom_call.1} parent=11 // pred_region
          %121 = vsyncadd [#allocation8], 0
          %s123 = sshll.u32 %s0, 4
          %s124 = int_to_ptr.hbm [resolvable:$true] %s123
          %126 = dma.hbm_to_smem %s124, 16, [#allocation5], [#allocation8]
        $region16: #{tpu_custom_call.1} parent=11 // pred_fallthru
          _
      $region12: #{tpu_custom_call.1} parent=5 // pred_fallthru
        _
      %p127 = scmp.lt.s32.totalorder %s15, 2
      // Predicated region
      $region17: #{tpu_custom_call.1} parent=5 // pred_check
        %p128 = pneg %p127
      $region18: #{tpu_custom_call.1} parent=5 // pred_check_branch
        %130 = sbr.rel (%p128) target = $region20
      $region19: #{tpu_custom_call.1} parent=5 // pred_region
        // Predicated region
        $region21: #{tpu_custom_call.1} parent=19 // pred_check
          %p131 = pneg %p70
        $region22: #{tpu_custom_call.1} parent=19 // pred_check_branch
          %133 = sbr.rel (%p131) target = $region24
        $region23: #{tpu_custom_call.1} parent=19 // pred_region
          %s134 = sand.u32 %s60, 1
          %s135 = scalar_lea.sflag [#allocation6], %s134
          %s136 = sand.u32 %s60, 1
          %s137 = smul.addr %s136, 64
          %s138 = scalar_lea.vmem [#allocation9], %s137
          %s139 = smul.u32 4, %s23
          %141 = vsyncadd %s135, 0
          %s142 = smul.addr %s139, 2
          %s143 = smul.addr %s22, 8
          %s144 = sadd.s32 %s142, %s143
          %s145 = smul.addr %s144, 8
          %s146 = scalar_lea.hbm %s1, %s145
          %s147 = sshll.u32 %s146, 4
          %s148 = int_to_ptr.hbm [resolvable:$true] %s147
          %s149 = sshll.u32 %s138, 4
          %s150 = int_to_ptr.vmem [resolvable:$true] %s149
          %155 = dma.hbm_to_vmem [thread:$0]  %s148, 1024, %s150, %s135, 128, 128, 8
        $region24: #{tpu_custom_call.1} parent=19 // pred_fallthru
          _
      $region20: #{tpu_custom_call.1} parent=5 // pred_fallthru
        _
      %p156 = scmp.le.s32.totalorder 1, %s15
      %p157 = scmp.lt.s32.totalorder %s15, 3
      %p158 = pnand %p156, %p157
      %p159 = pneg %p158
      // Predicated region
      $region25: #{tpu_custom_call.1} parent=5 // pred_check
        _
      $region26: #{tpu_custom_call.1} parent=5 // pred_check_branch
        %161 = sbr.rel (%p158) target = $region28
      $region27: #{tpu_custom_call.1} parent=5 // pred_region
        %s162 = ssub.s32 %s15, 1
        // Predicated region
        $region29: #{tpu_custom_call.1} parent=27 // pred_check
          %p163 = pneg %p48
        $region30: #{tpu_custom_call.1} parent=27 // pred_check_branch
          %165 = sbr.rel (%p163) target = $region32
        $region31: #{tpu_custom_call.1} parent=27 // pred_region
          %167 = dma.done [#allocation8], 16
        $region32: #{tpu_custom_call.1} parent=27 // pred_fallthru
          _
        %s168 = sand.u32 %s63, 1
        %s169 = scalar_lea.sflag [#allocation6], %s168
        %s170 = sand.u32 %s63, 1
        %s171 = smul.addr %s170, 64
        %s172 = scalar_lea.vmem [#allocation9], %s171
        // Predicated region
        $region33: #{tpu_custom_call.1} parent=27 // pred_check
          %p173 = pneg %p76
        $region34: #{tpu_custom_call.1} parent=27 // pred_check_branch
          %175 = sbr.rel (%p173) target = $region36
        $region35: #{tpu_custom_call.1} parent=27 // pred_region
          %177 = dma.done %s169, 1024
        $region36: #{tpu_custom_call.1} parent=27 // pred_fallthru
          _
        %178 = sfence
        %p179 = pneg %p48
        %p180 = pneg %p45
        %s181 = sand.u32 %s63, 1
        %s182 = scalar_lea.sflag [#allocation6], %s181
        %s183 = sand.u32 %s63, 1
        %s184 = smul.addr %s183, 64
        %s185 = scalar_lea.vmem [#allocation9], %s184
        %p186 = pneg %p76
        %p187 = pneg %p73
        %p188 = pneg %p102
        %p189 = pneg %p99
        %s190 = sand.u32 %s89, 1
        %s191 = scalar_lea.sflag [#allocation7], %s190
        %s192 = sand.u32 %s89, 1
        %s193 = smul.addr %s192, 16
        %s194 = scalar_lea.vmem [#allocation10], %s193
        %s195 = smul.u32 4, %s25
        %p196 = scmp.eq.s32.totalorder %s25, 0
        // Predicated region
        $region37: #{tpu_custom_call.1} parent=27 // pred_check
          %p197 = pneg %p196
        $region38: #{tpu_custom_call.1} parent=27 // pred_check_branch
          %199 = sbr.rel (%p197) target = $region40
        $region39: #{tpu_custom_call.1} parent=27 // pred_region
          %vm200 = vcmask 130048
          %201 = vst.msk [vmem:[#allocation2] sm:$0xff] %vm200, 0.0
          %202 = vst.msk [vmem:[#allocation2 + $0x8] sm:$0xff] %vm200, 0.0
          %203 = vst.msk [vmem:[#allocation3] sm:$0xff] %vm200, -inf
          %204 = vst.msk [vmem:[#allocation3 + $0x8] sm:$0xff] %vm200, -inf
        $region40: #{tpu_custom_call.1} parent=27 // pred_fallthru
          _
        %v205 = vld [vmem:[%s172] sm:$0xff]
        %v206 = vld [vmem:[%s172 + $0x8] sm:$0xff]
        %v207 = vld [vmem:[%s172 + $0x10] sm:$0xff]
        %v208 = vld [vmem:[%s172 + $0x18] sm:$0xff]
        %v209 = vld [vmem:[%s172 + $0x20] sm:$0xff]
        %v210 = vld [vmem:[%s172 + $0x28] sm:$0xff]
        %v211 = vld [vmem:[%s172 + $0x30] sm:$0xff]
        %v212 = vld [vmem:[%s172 + $0x38] sm:$0xff]
        %v213 = vld [vmem:[#allocation2] sm:$0xff]
        %v214 = vld [vmem:[#allocation2 + $0x8] sm:$0xff]
        %vm215 = vcmask 130048
        %v216 = vsel %vm215, %v205, 0.0
        %v217 = vsel %vm215, %v207, 0.0
        %v218 = vadd.f32 %v216, %v217
        %v219 = vsel %vm215, %v209, 0.0
        %v220 = vadd.f32 %v218, %v219
        %v221 = vsel %vm215, %v211, 0.0
        %v222 = vadd.f32 %v220, %v221
        %v223 = vsel %vm215, %v206, 0.0
        %v224 = vsel %vm215, %v208, 0.0
        %v225 = vadd.f32 %v223, %v224
        %v226 = vsel %vm215, %v210, 0.0
        %v227 = vadd.f32 %v225, %v226
        %v228 = vsel %vm215, %v212, 0.0
        %v229 = vadd.f32 %v227, %v228
        %v230 = vadd.f32 %v213, %v222
        %v231 = vadd.f32 %v214, %v229
        %232 = vst.msk [vmem:[#allocation2] sm:$0xff] %vm215, %v230
        %233 = vst.msk [vmem:[#allocation2 + $0x8] sm:$0xff] %vm215, %v231
        %v234 = vld [vmem:[#allocation3] sm:$0xff]
        %v235 = vld [vmem:[#allocation3 + $0x8] sm:$0xff]
        %v236 = vsel %vm215, %v205, -inf
        %v237 = vsel %vm215, %v207, -inf
        %v238 = vsel %vm215, %v209, -inf
        %v239 = vmax.f32 %v236, %v238
        %v240 = vsel %vm215, %v211, -inf
        %v241 = vmax.f32 %v237, %v240
        %v242 = vmax.f32 %v239, %v241
        %v243 = vsel %vm215, %v206, -inf
        %v244 = vsel %vm215, %v208, -inf
        %v245 = vsel %vm215, %v210, -inf
        %v246 = vmax.f32 %v243, %v245
        %v247 = vsel %vm215, %v212, -inf
        %v248 = vmax.f32 %v244, %v247
        %v249 = vmax.f32 %v246, %v248
        %v250 = vmax.f32 %v234, %v242
        %v251 = vmax.f32 %v235, %v249
        %252 = vst.msk [vmem:[#allocation3] sm:$0xff] %vm215, %v250
        %253 = vst.msk [vmem:[#allocation3 + $0x8] sm:$0xff] %vm215, %v251
        // Predicated region
        $region41: #{tpu_custom_call.1} parent=27 // pred_check
          %p254 = pneg %p196
        $region42: #{tpu_custom_call.1} parent=27 // pred_check_branch
          %256 = sbr.rel (%p254) target = $region44
        $region43: #{tpu_custom_call.1} parent=27 // pred_region
          %vm257 = vcmask 179200
          %258 = vst.msk [vmem:[#allocation4] sm:$0xff] %vm257, 0.0
          %259 = vst.msk [vmem:[#allocation4 + $0x8] sm:$0xff] %vm257, 0.0
          %vm260 = vcmask 177152
          %261 = vst.msk [vmem:[#allocation4 + $0x10] sm:$0x3f] %vm260, 0.0
          %262 = vst.msk [vmem:[#allocation4 + $0x18] sm:$0xff] %vm257, 0.0
          %263 = vst.msk [vmem:[#allocation4 + $0x20] sm:$0xff] %vm257, 0.0
          %264 = vst.msk [vmem:[#allocation4 + $0x28] sm:$0x3f] %vm260, 0.0
          %v265 = vld [vmem:[#allocation2] sm:$0xff]
          %v266 = vld [vmem:[#allocation2 + $0x8] sm:$0xff]
          %269 = vrot.lane.b32.xlu0 %v265, 3
          %v270 = vpop.permute.xlu0 %269
          %271 = vrot.lane.b32.xlu0 %v266, 3
          %v272 = vpop.permute.xlu0 %271
          %vm275 = vcmask 154648
          %276 = vst.msk [vmem:[#allocation4 + $0x3] sm:$0xff] %vm275, %v270
          %277 = vst.msk [vmem:[#allocation4 + $0xb] sm:$0xff] %vm275, %v272
          %v278 = vld [vmem:[#allocation3] sm:$0xff]
          %v279 = vld [vmem:[#allocation3 + $0x8] sm:$0xff]
          %282 = vrot.lane.b32.xlu0 %v278, 3
          %v283 = vpop.permute.xlu0 %282
          %284 = vrot.lane.b32.xlu0 %v279, 3
          %v285 = vpop.permute.xlu0 %284
          %s288 = scalar_lea.vmem [#allocation4], 24
          %289 = vst.msk [vmem:[%s288 + $0x3] sm:$0xff] %vm275, %v283
          %290 = vst.msk [vmem:[%s288 + $0xb] sm:$0xff] %vm275, %v285
          %s291 = sld [smem:[#allocation5]]
          %s292 = sld [smem:[#allocation5 + $0x31]]
          %v293 = vld [vmem:[#allocation4] sm:$0xff]
          %v294 = vld [vmem:[#allocation4 + $0x8] sm:$0xff]
          %v295 = vstv %s291
          %v296 = vmul.f32 %v295, %v293
          %v297 = vmul.f32 %v295, %v294
          %v298 = vadd.f32 %v296, 0.0
          %v299 = vadd.f32 %v297, 0.0
          %v300 = vld [vmem:[%s288] sm:$0xff]
          %v301 = vld [vmem:[%s288 + $0x8] sm:$0xff]
          %v302 = vstv %s292
          %v303 = vmul.f32 %v302, %v300
          %v304 = vmul.f32 %v302, %v301
          %v305 = vadd.f32 %v303, 0.0
          %v306 = vadd.f32 %v304, 0.0
          %s307 = sld [smem:[#allocation5 + $0x1]]
          %s308 = sld [smem:[#allocation5 + $0x32]]
          %v309 = vstv %s307
          %v310 = vmul.f32 %v309, %v293
          %v311 = vmul.f32 %v309, %v294
          %v312 = vadd.f32 %v310, 0.0
          %v313 = vadd.f32 %v311, 0.0
          %v314 = vstv %s308
          %v315 = vmul.f32 %v314, %v300
          %v316 = vmul.f32 %v314, %v301
          %v317 = vadd.f32 %v315, 0.0
          %v318 = vadd.f32 %v316, 0.0
          %s319 = sld [smem:[#allocation5 + $0x2]]
          %s320 = sld [smem:[#allocation5 + $0x33]]
          %v321 = vstv %s319
          %v322 = vmul.f32 %v321, %v293
          %v323 = vmul.f32 %v321, %v294
          %326 = vrot.lane.b32.xlu0 %v322, 126
          %v327 = vpop.permute.xlu0 %326
          %328 = vrot.lane.b32.xlu0 %v323, 126
          %v329 = vpop.permute.xlu0 %328
          %v332 = vadd.f32 %v298, %v327
          %v333 = vadd.f32 %v299, %v329
          %v334 = vstv %s320
          %v335 = vmul.f32 %v334, %v300
          %v336 = vmul.f32 %v334, %v301
          %339 = vrot.lane.b32.xlu0 %v335, 126
          %v340 = vpop.permute.xlu0 %339
          %341 = vrot.lane.b32.xlu0 %v336, 126
          %v342 = vpop.permute.xlu0 %341
          %v345 = vadd.f32 %v305, %v340
          %v346 = vadd.f32 %v306, %v342
          %s347 = sld [smem:[#allocation5 + $0x3]]
          %s348 = sld [smem:[#allocation5 + $0x34]]
          %v349 = vstv %s347
          %v350 = vmul.f32 %v349, %v293
          %v351 = vmul.f32 %v349, %v294
          %354 = vrot.lane.b32.xlu0 %v350, 126
          %v355 = vpop.permute.xlu0 %354
          %356 = vrot.lane.b32.xlu0 %v351, 126
          %v357 = vpop.permute.xlu0 %356
          %v360 = vadd.f32 %v312, %v355
          %v361 = vadd.f32 %v313, %v357
          %v362 = vstv %s348
          %v363 = vmul.f32 %v362, %v300
          %v364 = vmul.f32 %v362, %v301
          %367 = vrot.lane.b32.xlu0 %v363, 126
          %v368 = vpop.permute.xlu0 %367
          %369 = vrot.lane.b32.xlu0 %v364, 126
          %v370 = vpop.permute.xlu0 %369
          %v373 = vadd.f32 %v317, %v368
          %v374 = vadd.f32 %v318, %v370
          %s375 = sld [smem:[#allocation5 + $0x4]]
          %s376 = sld [smem:[#allocation5 + $0x35]]
          %v377 = vstv %s375
          %v378 = vmul.f32 %v377, %v293
          %v379 = vmul.f32 %v377, %v294
          %382 = vrot.lane.b32.xlu0 %v378, 124
          %v383 = vpop.permute.xlu0 %382
          %384 = vrot.lane.b32.xlu0 %v379, 124
          %v385 = vpop.permute.xlu0 %384
          %v388 = vadd.f32 %v332, %v383
          %v389 = vadd.f32 %v333, %v385
          %v390 = vstv %s376
          %v391 = vmul.f32 %v390, %v300
          %v392 = vmul.f32 %v390, %v301
          %395 = vrot.lane.b32.xlu0 %v391, 124
          %v396 = vpop.permute.xlu0 %395
          %397 = vrot.lane.b32.xlu0 %v392, 124
          %v398 = vpop.permute.xlu0 %397
          %v401 = vadd.f32 %v345, %v396
          %v402 = vadd.f32 %v346, %v398
          %s403 = sld [smem:[#allocation5 + $0x5]]
          %s404 = sld [smem:[#allocation5 + $0x36]]
          %v405 = vstv %s403
          %v406 = vmul.f32 %v405, %v293
          %v407 = vmul.f32 %v405, %v294
          %410 = vrot.lane.b32.xlu0 %v406, 124
          %v411 = vpop.permute.xlu0 %410
          %412 = vrot.lane.b32.xlu0 %v407, 124
          %v413 = vpop.permute.xlu0 %412
          %v416 = vadd.f32 %v360, %v411
          %v417 = vadd.f32 %v361, %v413
          %v418 = vstv %s404
          %v419 = vmul.f32 %v418, %v300
          %v420 = vmul.f32 %v418, %v301
          %423 = vrot.lane.b32.xlu0 %v419, 124
          %v424 = vpop.permute.xlu0 %423
          %425 = vrot.lane.b32.xlu0 %v420, 124
          %v426 = vpop.permute.xlu0 %425
          %v429 = vadd.f32 %v373, %v424
          %v430 = vadd.f32 %v374, %v426
          %s431 = sld [smem:[#allocation5 + $0x6]]
          %s432 = sld [smem:[#allocation5 + $0x37]]
          %v433 = vstv %s431
          %v434 = vmul.f32 %v433, %v293
          %v435 = vmul.f32 %v433, %v294
          %438 = vrot.lane.b32.xlu0 %v434, 122
          %v439 = vpop.permute.xlu0 %438
          %440 = vrot.lane.b32.xlu0 %v435, 122
          %v441 = vpop.permute.xlu0 %440
          %v444 = vadd.f32 %v388, %v439
          %v445 = vadd.f32 %v389, %v441
          %v446 = vstv %s432
          %v447 = vmul.f32 %v446, %v300
          %v448 = vmul.f32 %v446, %v301
          %451 = vrot.lane.b32.xlu0 %v447, 122
          %v452 = vpop.permute.xlu0 %451
          %453 = vrot.lane.b32.xlu0 %v448, 122
          %v454 = vpop.permute.xlu0 %453
          %v457 = vadd.f32 %v401, %v452
          %v458 = vadd.f32 %v402, %v454
          %s459 = sld [smem:[#allocation5 + $0x7]]
          %s460 = sld [smem:[#allocation5 + $0x38]]
          %v461 = vld [vmem:[#allocation4 + $0x1] sm:$0xff]
          %v462 = vld [vmem:[#allocation4 + $0x9] sm:$0xff]
          %v463 = vstv %s459
          %v464 = vmul.f32 %v463, %v461
          %v465 = vmul.f32 %v463, %v462
          %468 = vrot.lane.b32.xlu0 %v464, 1
          %v469 = vpop.permute.xlu0 %468
          %470 = vrot.lane.b32.xlu0 %v465, 1
          %v471 = vpop.permute.xlu0 %470
          %v474 = vadd.f32 %v416, %v469
          %v475 = vadd.f32 %v417, %v471
          %v476 = vld [vmem:[%s288 + $0x1] sm:$0xff]
          %v477 = vld [vmem:[%s288 + $0x9] sm:$0xff]
          %v478 = vstv %s460
          %v479 = vmul.f32 %v478, %v476
          %v480 = vmul.f32 %v478, %v477
          %483 = vrot.lane.b32.xlu0 %v479, 1
          %v484 = vpop.permute.xlu0 %483
          %485 = vrot.lane.b32.xlu0 %v480, 1
          %v486 = vpop.permute.xlu0 %485
          %v489 = vadd.f32 %v429, %v484
          %v490 = vadd.f32 %v430, %v486
          %s491 = sld [smem:[#allocation5 + $0x8]]
          %s492 = sld [smem:[#allocation5 + $0x39]]
          %v493 = vstv %s491
          %v494 = vmul.f32 %v493, %v461
          %v495 = vmul.f32 %v493, %v462
          %498 = vrot.lane.b32.xlu0 %v494, 127
          %v499 = vpop.permute.xlu0 %498
          %500 = vrot.lane.b32.xlu0 %v495, 127
          %v501 = vpop.permute.xlu0 %500
          %v504 = vadd.f32 %v444, %v499
          %v505 = vadd.f32 %v445, %v501
          %v506 = vstv %s492
          %v507 = vmul.f32 %v506, %v476
          %v508 = vmul.f32 %v506, %v477
          %511 = vrot.lane.b32.xlu0 %v507, 127
          %v512 = vpop.permute.xlu0 %511
          %513 = vrot.lane.b32.xlu0 %v508, 127
          %v514 = vpop.permute.xlu0 %513
          %v517 = vadd.f32 %v457, %v512
          %v518 = vadd.f32 %v458, %v514
          %s519 = sld [smem:[#allocation5 + $0x9]]
          %s520 = sld [smem:[#allocation5 + $0x3a]]
          %v521 = vstv %s519
          %v522 = vmul.f32 %v521, %v461
          %v523 = vmul.f32 %v521, %v462
          %526 = vrot.lane.b32.xlu0 %v522, 127
          %v527 = vpop.permute.xlu0 %526
          %528 = vrot.lane.b32.xlu0 %v523, 127
          %v529 = vpop.permute.xlu0 %528
          %v532 = vadd.f32 %v474, %v527
          %v533 = vadd.f32 %v475, %v529
          %v534 = vstv %s520
          %v535 = vmul.f32 %v534, %v476
          %v536 = vmul.f32 %v534, %v477
          %539 = vrot.lane.b32.xlu0 %v535, 127
          %v540 = vpop.permute.xlu0 %539
          %541 = vrot.lane.b32.xlu0 %v536, 127
          %v542 = vpop.permute.xlu0 %541
          %v545 = vadd.f32 %v489, %v540
          %v546 = vadd.f32 %v490, %v542
          %s547 = sld [smem:[#allocation5 + $0xa]]
          %s548 = sld [smem:[#allocation5 + $0x3b]]
          %v549 = vstv %s547
          %v550 = vmul.f32 %v549, %v461
          %v551 = vmul.f32 %v549, %v462
          %554 = vrot.lane.b32.xlu0 %v550, 125
          %v555 = vpop.permute.xlu0 %554
          %556 = vrot.lane.b32.xlu0 %v551, 125
          %v557 = vpop.permute.xlu0 %556
          %v560 = vadd.f32 %v504, %v555
          %v561 = vadd.f32 %v505, %v557
          %v562 = vstv %s548
          %v563 = vmul.f32 %v562, %v476
          %v564 = vmul.f32 %v562, %v477
          %567 = vrot.lane.b32.xlu0 %v563, 125
          %v568 = vpop.permute.xlu0 %567
          %569 = vrot.lane.b32.xlu0 %v564, 125
          %v570 = vpop.permute.xlu0 %569
          %v573 = vadd.f32 %v517, %v568
          %v574 = vadd.f32 %v518, %v570
          %s575 = sld [smem:[#allocation5 + $0xb]]
          %s576 = sld [smem:[#allocation5 + $0x3c]]
          %v577 = vstv %s575
          %v578 = vmul.f32 %v577, %v461
          %v579 = vmul.f32 %v577, %v462
          %582 = vrot.lane.b32.xlu0 %v578, 125
          %v583 = vpop.permute.xlu0 %582
          %584 = vrot.lane.b32.xlu0 %v579, 125
          %v585 = vpop.permute.xlu0 %584
          %v588 = vadd.f32 %v532, %v583
          %v589 = vadd.f32 %v533, %v585
          %v590 = vstv %s576
          %v591 = vmul.f32 %v590, %v476
          %v592 = vmul.f32 %v590, %v477
          %595 = vrot.lane.b32.xlu0 %v591, 125
          %v596 = vpop.permute.xlu0 %595
          %597 = vrot.lane.b32.xlu0 %v592, 125
          %v598 = vpop.permute.xlu0 %597
          %v601 = vadd.f32 %v545, %v596
          %v602 = vadd.f32 %v546, %v598
          %s603 = sld [smem:[#allocation5 + $0xc]]
          %s604 = sld [smem:[#allocation5 + $0x3d]]
          %v605 = vstv %s603
          %v606 = vmul.f32 %v605, %v461
          %v607 = vmul.f32 %v605, %v462
          %610 = vrot.lane.b32.xlu0 %v606, 123
          %v611 = vpop.permute.xlu0 %610
          %612 = vrot.lane.b32.xlu0 %v607, 123
          %v613 = vpop.permute.xlu0 %612
          %v616 = vadd.f32 %v560, %v611
          %v617 = vadd.f32 %v561, %v613
          %v618 = vstv %s604
          %v619 = vmul.f32 %v618, %v476
          %v620 = vmul.f32 %v618, %v477
          %623 = vrot.lane.b32.xlu0 %v619, 123
          %v624 = vpop.permute.xlu0 %623
          %625 = vrot.lane.b32.xlu0 %v620, 123
          %v626 = vpop.permute.xlu0 %625
          %v629 = vadd.f32 %v573, %v624
          %v630 = vadd.f32 %v574, %v626
          %s631 = sld [smem:[#allocation5 + $0xd]]
          %s632 = sld [smem:[#allocation5 + $0x3e]]
          %v633 = vstv %s631
          %v634 = vmul.f32 %v633, %v461
          %v635 = vmul.f32 %v633, %v462
          %638 = vrot.lane.b32.xlu0 %v634, 123
          %v639 = vpop.permute.xlu0 %638
          %640 = vrot.lane.b32.xlu0 %v635, 123
          %v641 = vpop.permute.xlu0 %640
          %v644 = vadd.f32 %v588, %v639
          %v645 = vadd.f32 %v589, %v641
          %v646 = vstv %s632
          %v647 = vmul.f32 %v646, %v476
          %v648 = vmul.f32 %v646, %v477
          %651 = vrot.lane.b32.xlu0 %v647, 123
          %v652 = vpop.permute.xlu0 %651
          %653 = vrot.lane.b32.xlu0 %v648, 123
          %v654 = vpop.permute.xlu0 %653
          %v657 = vadd.f32 %v601, %v652
          %v658 = vadd.f32 %v602, %v654
          %s659 = sld [smem:[#allocation5 + $0xe]]
          %s660 = sld [smem:[#allocation5 + $0x3f]]
          %v661 = vld [vmem:[#allocation4 + $0x2] sm:$0xff]
          %v662 = vld [vmem:[#allocation4 + $0xa] sm:$0xff]
          %v663 = vstv %s659
          %v664 = vmul.f32 %v663, %v661
          %v665 = vmul.f32 %v663, %v662
          %v666 = vadd.f32 %v616, %v664
          %v667 = vadd.f32 %v617, %v665
          %v668 = vld [vmem:[%s288 + $0x2] sm:$0xff]
          %v669 = vld [vmem:[%s288 + $0xa] sm:$0xff]
          %v670 = vstv %s660
          %v671 = vmul.f32 %v670, %v668
          %v672 = vmul.f32 %v670, %v669
          %v673 = vadd.f32 %v629, %v671
          %v674 = vadd.f32 %v630, %v672
          %s675 = sld [smem:[#allocation5 + $0xf]]
          %s676 = sld [smem:[#allocation5 + $0x40]]
          %v677 = vstv %s675
          %v678 = vmul.f32 %v677, %v661
          %v679 = vmul.f32 %v677, %v662
          %v680 = vadd.f32 %v644, %v678
          %v681 = vadd.f32 %v645, %v679
          %v682 = vstv %s676
          %v683 = vmul.f32 %v682, %v668
          %v684 = vmul.f32 %v682, %v669
          %v685 = vadd.f32 %v657, %v683
          %v686 = vadd.f32 %v658, %v684
          %s687 = sld [smem:[#allocation5 + $0x10]]
          %s688 = sld [smem:[#allocation5 + $0x41]]
          %v689 = vstv %s687
          %v690 = vmul.f32 %v689, %v661
          %v691 = vmul.f32 %v689, %v662
          %694 = vrot.lane.b32.xlu0 %v690, 126
          %v695 = vpop.permute.xlu0 %694
          %696 = vrot.lane.b32.xlu0 %v691, 126
          %v697 = vpop.permute.xlu0 %696
          %v700 = vadd.f32 %v666, %v695
          %v701 = vadd.f32 %v667, %v697
          %v702 = vstv %s688
          %v703 = vmul.f32 %v702, %v668
          %v704 = vmul.f32 %v702, %v669
          %707 = vrot.lane.b32.xlu0 %v703, 126
          %v708 = vpop.permute.xlu0 %707
          %709 = vrot.lane.b32.xlu0 %v704, 126
          %v710 = vpop.permute.xlu0 %709
          %v713 = vadd.f32 %v673, %v708
          %v714 = vadd.f32 %v674, %v710
          %s715 = sld [smem:[#allocation5 + $0x11]]
          %s716 = sld [smem:[#allocation5 + $0x42]]
          %v717 = vstv %s715
          %v718 = vmul.f32 %v717, %v661
          %v719 = vmul.f32 %v717, %v662
          %722 = vrot.lane.b32.xlu0 %v718, 126
          %v723 = vpop.permute.xlu0 %722
          %724 = vrot.lane.b32.xlu0 %v719, 126
          %v725 = vpop.permute.xlu0 %724
          %v728 = vadd.f32 %v680, %v723
          %v729 = vadd.f32 %v681, %v725
          %v730 = vstv %s716
          %v731 = vmul.f32 %v730, %v668
          %v732 = vmul.f32 %v730, %v669
          %735 = vrot.lane.b32.xlu0 %v731, 126
          %v736 = vpop.permute.xlu0 %735
          %737 = vrot.lane.b32.xlu0 %v732, 126
          %v738 = vpop.permute.xlu0 %737
          %v741 = vadd.f32 %v685, %v736
          %v742 = vadd.f32 %v686, %v738
          %s743 = sld [smem:[#allocation5 + $0x12]]
          %s744 = sld [smem:[#allocation5 + $0x43]]
          %v745 = vstv %s743
          %v746 = vmul.f32 %v745, %v661
          %v747 = vmul.f32 %v745, %v662
          %750 = vrot.lane.b32.xlu0 %v746, 124
          %v751 = vpop.permute.xlu0 %750
          %752 = vrot.lane.b32.xlu0 %v747, 124
          %v753 = vpop.permute.xlu0 %752
          %v756 = vadd.f32 %v700, %v751
          %v757 = vadd.f32 %v701, %v753
          %v758 = vstv %s744
          %v759 = vmul.f32 %v758, %v668
          %v760 = vmul.f32 %v758, %v669
          %763 = vrot.lane.b32.xlu0 %v759, 124
          %v764 = vpop.permute.xlu0 %763
          %765 = vrot.lane.b32.xlu0 %v760, 124
          %v766 = vpop.permute.xlu0 %765
          %v769 = vadd.f32 %v713, %v764
          %v770 = vadd.f32 %v714, %v766
          %s771 = sld [smem:[#allocation5 + $0x13]]
          %s772 = sld [smem:[#allocation5 + $0x44]]
          %v773 = vstv %s771
          %v774 = vmul.f32 %v773, %v661
          %v775 = vmul.f32 %v773, %v662
          %778 = vrot.lane.b32.xlu0 %v774, 124
          %v779 = vpop.permute.xlu0 %778
          %780 = vrot.lane.b32.xlu0 %v775, 124
          %v781 = vpop.permute.xlu0 %780
          %v784 = vadd.f32 %v728, %v779
          %v785 = vadd.f32 %v729, %v781
          %v786 = vstv %s772
          %v787 = vmul.f32 %v786, %v668
          %v788 = vmul.f32 %v786, %v669
          %791 = vrot.lane.b32.xlu0 %v787, 124
          %v792 = vpop.permute.xlu0 %791
          %793 = vrot.lane.b32.xlu0 %v788, 124
          %v794 = vpop.permute.xlu0 %793
          %v797 = vadd.f32 %v741, %v792
          %v798 = vadd.f32 %v742, %v794
          %s799 = sld [smem:[#allocation5 + $0x14]]
          %s800 = sld [smem:[#allocation5 + $0x45]]
          %v801 = vstv %s799
          %v802 = vmul.f32 %v801, %v661
          %v803 = vmul.f32 %v801, %v662
          %806 = vrot.lane.b32.xlu0 %v802, 122
          %v807 = vpop.permute.xlu0 %806
          %808 = vrot.lane.b32.xlu0 %v803, 122
          %v809 = vpop.permute.xlu0 %808
          %v812 = vadd.f32 %v756, %v807
          %v813 = vadd.f32 %v757, %v809
          %v814 = vstv %s800
          %v815 = vmul.f32 %v814, %v668
          %v816 = vmul.f32 %v814, %v669
          %819 = vrot.lane.b32.xlu0 %v815, 122
          %v820 = vpop.permute.xlu0 %819
          %821 = vrot.lane.b32.xlu0 %v816, 122
          %v822 = vpop.permute.xlu0 %821
          %v825 = vadd.f32 %v769, %v820
          %v826 = vadd.f32 %v770, %v822
          %s827 = sld [smem:[#allocation5 + $0x15]]
          %s828 = sld [smem:[#allocation5 + $0x46]]
          %v829 = vld [vmem:[#allocation4 + $0x3] sm:$0xff]
          %v830 = vld [vmem:[#allocation4 + $0xb] sm:$0xff]
          %v831 = vstv %s827
          %v832 = vmul.f32 %v831, %v829
          %v833 = vmul.f32 %v831, %v830
          %836 = vrot.lane.b32.xlu0 %v832, 1
          %v837 = vpop.permute.xlu0 %836
          %838 = vrot.lane.b32.xlu0 %v833, 1
          %v839 = vpop.permute.xlu0 %838
          %v842 = vadd.f32 %v784, %v837
          %v843 = vadd.f32 %v785, %v839
          %v844 = vld [vmem:[%s288 + $0x3] sm:$0xff]
          %v845 = vld [vmem:[%s288 + $0xb] sm:$0xff]
          %v846 = vstv %s828
          %v847 = vmul.f32 %v846, %v844
          %v848 = vmul.f32 %v846, %v845
          %851 = vrot.lane.b32.xlu0 %v847, 1
          %v852 = vpop.permute.xlu0 %851
          %853 = vrot.lane.b32.xlu0 %v848, 1
          %v854 = vpop.permute.xlu0 %853
          %v857 = vadd.f32 %v797, %v852
          %v858 = vadd.f32 %v798, %v854
          %s859 = sld [smem:[#allocation5 + $0x16]]
          %s860 = sld [smem:[#allocation5 + $0x47]]
          %v861 = vstv %s859
          %v862 = vmul.f32 %v861, %v829
          %v863 = vmul.f32 %v861, %v830
          %866 = vrot.lane.b32.xlu0 %v862, 127
          %v867 = vpop.permute.xlu0 %866
          %868 = vrot.lane.b32.xlu0 %v863, 127
          %v869 = vpop.permute.xlu0 %868
          %v872 = vadd.f32 %v812, %v867
          %v873 = vadd.f32 %v813, %v869
          %v874 = vstv %s860
          %v875 = vmul.f32 %v874, %v844
          %v876 = vmul.f32 %v874, %v845
          %879 = vrot.lane.b32.xlu0 %v875, 127
          %v880 = vpop.permute.xlu0 %879
          %881 = vrot.lane.b32.xlu0 %v876, 127
          %v882 = vpop.permute.xlu0 %881
          %v885 = vadd.f32 %v825, %v880
          %v886 = vadd.f32 %v826, %v882
          %s887 = sld [smem:[#allocation5 + $0x17]]
          %s888 = sld [smem:[#allocation5 + $0x48]]
          %v889 = vstv %s887
          %v890 = vmul.f32 %v889, %v829
          %v891 = vmul.f32 %v889, %v830
          %894 = vrot.lane.b32.xlu0 %v890, 127
          %v895 = vpop.permute.xlu0 %894
          %896 = vrot.lane.b32.xlu0 %v891, 127
          %v897 = vpop.permute.xlu0 %896
          %v900 = vadd.f32 %v842, %v895
          %v901 = vadd.f32 %v843, %v897
          %v902 = vstv %s888
          %v903 = vmul.f32 %v902, %v844
          %v904 = vmul.f32 %v902, %v845
          %907 = vrot.lane.b32.xlu0 %v903, 127
          %v908 = vpop.permute.xlu0 %907
          %909 = vrot.lane.b32.xlu0 %v904, 127
          %v910 = vpop.permute.xlu0 %909
          %v913 = vadd.f32 %v857, %v908
          %v914 = vadd.f32 %v858, %v910
          %s915 = sld [smem:[#allocation5 + $0x18]]
          %s916 = sld [smem:[#allocation5 + $0x49]]
          %v917 = vstv %s915
          %v918 = vmul.f32 %v917, %v829
          %v919 = vmul.f32 %v917, %v830
          %922 = vrot.lane.b32.xlu0 %v918, 125
          %v923 = vpop.permute.xlu0 %922
          %924 = vrot.lane.b32.xlu0 %v919, 125
          %v925 = vpop.permute.xlu0 %924
          %v928 = vadd.f32 %v872, %v923
          %v929 = vadd.f32 %v873, %v925
          %v930 = vstv %s916
          %v931 = vmul.f32 %v930, %v844
          %v932 = vmul.f32 %v930, %v845
          %935 = vrot.lane.b32.xlu0 %v931, 125
          %v936 = vpop.permute.xlu0 %935
          %937 = vrot.lane.b32.xlu0 %v932, 125
          %v938 = vpop.permute.xlu0 %937
          %v941 = vadd.f32 %v885, %v936
          %v942 = vadd.f32 %v886, %v938
          %s943 = sld [smem:[#allocation5 + $0x19]]
          %s944 = sld [smem:[#allocation5 + $0x4a]]
          %v945 = vstv %s943
          %v946 = vmul.f32 %v945, %v829
          %v947 = vmul.f32 %v945, %v830
          %950 = vrot.lane.b32.xlu0 %v946, 125
          %v951 = vpop.permute.xlu0 %950
          %952 = vrot.lane.b32.xlu0 %v947, 125
          %v953 = vpop.permute.xlu0 %952
          %v956 = vadd.f32 %v900, %v951
          %v957 = vadd.f32 %v901, %v953
          %v958 = vstv %s944
          %v959 = vmul.f32 %v958, %v844
          %v960 = vmul.f32 %v958, %v845
          %963 = vrot.lane.b32.xlu0 %v959, 125
          %v964 = vpop.permute.xlu0 %963
          %965 = vrot.lane.b32.xlu0 %v960, 125
          %v966 = vpop.permute.xlu0 %965
          %v969 = vadd.f32 %v913, %v964
          %v970 = vadd.f32 %v914, %v966
          %s971 = sld [smem:[#allocation5 + $0x1a]]
          %s972 = sld [smem:[#allocation5 + $0x4b]]
          %v973 = vstv %s971
          %v974 = vmul.f32 %v973, %v829
          %v975 = vmul.f32 %v973, %v830
          %978 = vrot.lane.b32.xlu0 %v974, 123
          %v979 = vpop.permute.xlu0 %978
          %980 = vrot.lane.b32.xlu0 %v975, 123
          %v981 = vpop.permute.xlu0 %980
          %v984 = vadd.f32 %v928, %v979
          %v985 = vadd.f32 %v929, %v981
          %v986 = vstv %s972
          %v987 = vmul.f32 %v986, %v844
          %v988 = vmul.f32 %v986, %v845
          %991 = vrot.lane.b32.xlu0 %v987, 123
          %v992 = vpop.permute.xlu0 %991
          %993 = vrot.lane.b32.xlu0 %v988, 123
          %v994 = vpop.permute.xlu0 %993
          %v997 = vadd.f32 %v941, %v992
          %v998 = vadd.f32 %v942, %v994
          %s999 = sld [smem:[#allocation5 + $0x1b]]
          %s1000 = sld [smem:[#allocation5 + $0x4c]]
          %v1001 = vstv %s999
          %v1002 = vmul.f32 %v1001, %v829
          %v1003 = vmul.f32 %v1001, %v830
          %1006 = vrot.lane.b32.xlu0 %v1002, 123
          %v1007 = vpop.permute.xlu0 %1006
          %1008 = vrot.lane.b32.xlu0 %v1003, 123
          %v1009 = vpop.permute.xlu0 %1008
          %v1012 = vadd.f32 %v956, %v1007
          %v1013 = vadd.f32 %v957, %v1009
          %v1014 = vstv %s1000
          %v1015 = vmul.f32 %v1014, %v844
          %v1016 = vmul.f32 %v1014, %v845
          %1019 = vrot.lane.b32.xlu0 %v1015, 123
          %v1020 = vpop.permute.xlu0 %1019
          %1021 = vrot.lane.b32.xlu0 %v1016, 123
          %v1022 = vpop.permute.xlu0 %1021
          %v1025 = vadd.f32 %v969, %v1020
          %v1026 = vadd.f32 %v970, %v1022
          %s1027 = sld [smem:[#allocation5 + $0x1c]]
          %s1028 = sld [smem:[#allocation5 + $0x4d]]
          %v1029 = vld [vmem:[#allocation4 + $0x4] sm:$0xff]
          %v1030 = vld [vmem:[#allocation4 + $0xc] sm:$0xff]
          %v1031 = vstv %s1027
          %v1032 = vmul.f32 %v1031, %v1029
          %v1033 = vmul.f32 %v1031, %v1030
          %v1034 = vadd.f32 %v984, %v1032
          %v1035 = vadd.f32 %v985, %v1033
          %v1036 = vld [vmem:[%s288 + $0x4] sm:$0xff]
          %v1037 = vld [vmem:[%s288 + $0xc] sm:$0xff]
          %v1038 = vstv %s1028
          %v1039 = vmul.f32 %v1038, %v1036
          %v1040 = vmul.f32 %v1038, %v1037
          %v1041 = vadd.f32 %v997, %v1039
          %v1042 = vadd.f32 %v998, %v1040
          %s1043 = sld [smem:[#allocation5 + $0x1d]]
          %s1044 = sld [smem:[#allocation5 + $0x4e]]
          %v1045 = vstv %s1043
          %v1046 = vmul.f32 %v1045, %v1029
          %v1047 = vmul.f32 %v1045, %v1030
          %v1048 = vadd.f32 %v1012, %v1046
          %v1049 = vadd.f32 %v1013, %v1047
          %v1050 = vstv %s1044
          %v1051 = vmul.f32 %v1050, %v1036
          %v1052 = vmul.f32 %v1050, %v1037
          %v1053 = vadd.f32 %v1025, %v1051
          %v1054 = vadd.f32 %v1026, %v1052
          %s1055 = sld [smem:[#allocation5 + $0x1e]]
          %s1056 = sld [smem:[#allocation5 + $0x4f]]
          %v1057 = vstv %s1055
          %v1058 = vmul.f32 %v1057, %v1029
          %v1059 = vmul.f32 %v1057, %v1030
          %1062 = vrot.lane.b32.xlu0 %v1058, 126
          %v1063 = vpop.permute.xlu0 %1062
          %1064 = vrot.lane.b32.xlu0 %v1059, 126
          %v1065 = vpop.permute.xlu0 %1064
          %v1068 = vadd.f32 %v1034, %v1063
          %v1069 = vadd.f32 %v1035, %v1065
          %v1070 = vstv %s1056
          %v1071 = vmul.f32 %v1070, %v1036
          %v1072 = vmul.f32 %v1070, %v1037
          %1075 = vrot.lane.b32.xlu0 %v1071, 126
          %v1076 = vpop.permute.xlu0 %1075
          %1077 = vrot.lane.b32.xlu0 %v1072, 126
          %v1078 = vpop.permute.xlu0 %1077
          %v1081 = vadd.f32 %v1041, %v1076
          %v1082 = vadd.f32 %v1042, %v1078
          %s1083 = sld [smem:[#allocation5 + $0x1f]]
          %s1084 = sld [smem:[#allocation5 + $0x50]]
          %v1085 = vstv %s1083
          %v1086 = vmul.f32 %v1085, %v1029
          %v1087 = vmul.f32 %v1085, %v1030
          %1090 = vrot.lane.b32.xlu0 %v1086, 126
          %v1091 = vpop.permute.xlu0 %1090
          %1092 = vrot.lane.b32.xlu0 %v1087, 126
          %v1093 = vpop.permute.xlu0 %1092
          %v1096 = vadd.f32 %v1048, %v1091
          %v1097 = vadd.f32 %v1049, %v1093
          %v1098 = vstv %s1084
          %v1099 = vmul.f32 %v1098, %v1036
          %v1100 = vmul.f32 %v1098, %v1037
          %1103 = vrot.lane.b32.xlu0 %v1099, 126
          %v1104 = vpop.permute.xlu0 %1103
          %1105 = vrot.lane.b32.xlu0 %v1100, 126
          %v1106 = vpop.permute.xlu0 %1105
          %v1109 = vadd.f32 %v1053, %v1104
          %v1110 = vadd.f32 %v1054, %v1106
          %s1111 = sld [smem:[#allocation5 + $0x20]]
          %s1112 = sld [smem:[#allocation5 + $0x51]]
          %v1113 = vstv %s1111
          %v1114 = vmul.f32 %v1113, %v1029
          %v1115 = vmul.f32 %v1113, %v1030
          %1118 = vrot.lane.b32.xlu0 %v1114, 124
          %v1119 = vpop.permute.xlu0 %1118
          %1120 = vrot.lane.b32.xlu0 %v1115, 124
          %v1121 = vpop.permute.xlu0 %1120
          %v1124 = vadd.f32 %v1068, %v1119
          %v1125 = vadd.f32 %v1069, %v1121
          %v1126 = vstv %s1112
          %v1127 = vmul.f32 %v1126, %v1036
          %v1128 = vmul.f32 %v1126, %v1037
          %1131 = vrot.lane.b32.xlu0 %v1127, 124
          %v1132 = vpop.permute.xlu0 %1131
          %1133 = vrot.lane.b32.xlu0 %v1128, 124
          %v1134 = vpop.permute.xlu0 %1133
          %v1137 = vadd.f32 %v1081, %v1132
          %v1138 = vadd.f32 %v1082, %v1134
          %s1139 = sld [smem:[#allocation5 + $0x21]]
          %s1140 = sld [smem:[#allocation5 + $0x52]]
          %v1141 = vstv %s1139
          %v1142 = vmul.f32 %v1141, %v1029
          %v1143 = vmul.f32 %v1141, %v1030
          %1146 = vrot.lane.b32.xlu0 %v1142, 124
          %v1147 = vpop.permute.xlu0 %1146
          %1148 = vrot.lane.b32.xlu0 %v1143, 124
          %v1149 = vpop.permute.xlu0 %1148
          %v1152 = vadd.f32 %v1096, %v1147
          %v1153 = vadd.f32 %v1097, %v1149
          %v1154 = vstv %s1140
          %v1155 = vmul.f32 %v1154, %v1036
          %v1156 = vmul.f32 %v1154, %v1037
          %1159 = vrot.lane.b32.xlu0 %v1155, 124
          %v1160 = vpop.permute.xlu0 %1159
          %1161 = vrot.lane.b32.xlu0 %v1156, 124
          %v1162 = vpop.permute.xlu0 %1161
          %v1165 = vadd.f32 %v1109, %v1160
          %v1166 = vadd.f32 %v1110, %v1162
          %s1167 = sld [smem:[#allocation5 + $0x22]]
          %s1168 = sld [smem:[#allocation5 + $0x53]]
          %v1169 = vstv %s1167
          %v1170 = vmul.f32 %v1169, %v1029
          %v1171 = vmul.f32 %v1169, %v1030
          %1174 = vrot.lane.b32.xlu0 %v1170, 122
          %v1175 = vpop.permute.xlu0 %1174
          %1176 = vrot.lane.b32.xlu0 %v1171, 122
          %v1177 = vpop.permute.xlu0 %1176
          %v1180 = vadd.f32 %v1124, %v1175
          %v1181 = vadd.f32 %v1125, %v1177
          %v1182 = vstv %s1168
          %v1183 = vmul.f32 %v1182, %v1036
          %v1184 = vmul.f32 %v1182, %v1037
          %1187 = vrot.lane.b32.xlu0 %v1183, 122
          %v1188 = vpop.permute.xlu0 %1187
          %1189 = vrot.lane.b32.xlu0 %v1184, 122
          %v1190 = vpop.permute.xlu0 %1189
          %v1193 = vadd.f32 %v1137, %v1188
          %v1194 = vadd.f32 %v1138, %v1190
          %s1195 = sld [smem:[#allocation5 + $0x23]]
          %s1196 = sld [smem:[#allocation5 + $0x54]]
          %v1197 = vld [vmem:[#allocation4 + $0x5] sm:$0xff]
          %v1198 = vld [vmem:[#allocation4 + $0xd] sm:$0xff]
          %v1199 = vstv %s1195
          %v1200 = vmul.f32 %v1199, %v1197
          %v1201 = vmul.f32 %v1199, %v1198
          %1204 = vrot.lane.b32.xlu0 %v1200, 1
          %v1205 = vpop.permute.xlu0 %1204
          %1206 = vrot.lane.b32.xlu0 %v1201, 1
          %v1207 = vpop.permute.xlu0 %1206
          %v1210 = vadd.f32 %v1152, %v1205
          %v1211 = vadd.f32 %v1153, %v1207
          %v1212 = vld [vmem:[%s288 + $0x5] sm:$0xff]
          %v1213 = vld [vmem:[%s288 + $0xd] sm:$0xff]
          %v1214 = vstv %s1196
          %v1215 = vmul.f32 %v1214, %v1212
          %v1216 = vmul.f32 %v1214, %v1213
          %1219 = vrot.lane.b32.xlu0 %v1215, 1
          %v1220 = vpop.permute.xlu0 %1219
          %1221 = vrot.lane.b32.xlu0 %v1216, 1
          %v1222 = vpop.permute.xlu0 %1221
          %v1225 = vadd.f32 %v1165, %v1220
          %v1226 = vadd.f32 %v1166, %v1222
          %s1227 = sld [smem:[#allocation5 + $0x24]]
          %s1228 = sld [smem:[#allocation5 + $0x55]]
          %v1229 = vstv %s1227
          %v1230 = vmul.f32 %v1229, %v1197
          %v1231 = vmul.f32 %v1229, %v1198
          %1234 = vrot.lane.b32.xlu0 %v1230, 127
          %v1235 = vpop.permute.xlu0 %1234
          %1236 = vrot.lane.b32.xlu0 %v1231, 127
          %v1237 = vpop.permute.xlu0 %1236
          %v1240 = vadd.f32 %v1180, %v1235
          %v1241 = vadd.f32 %v1181, %v1237
          %v1242 = vstv %s1228
          %v1243 = vmul.f32 %v1242, %v1212
          %v1244 = vmul.f32 %v1242, %v1213
          %1247 = vrot.lane.b32.xlu0 %v1243, 127
          %v1248 = vpop.permute.xlu0 %1247
          %1249 = vrot.lane.b32.xlu0 %v1244, 127
          %v1250 = vpop.permute.xlu0 %1249
          %v1253 = vadd.f32 %v1193, %v1248
          %v1254 = vadd.f32 %v1194, %v1250
          %s1255 = sld [smem:[#allocation5 + $0x25]]
          %s1256 = sld [smem:[#allocation5 + $0x56]]
          %v1257 = vstv %s1255
          %v1258 = vmul.f32 %v1257, %v1197
          %v1259 = vmul.f32 %v1257, %v1198
          %1262 = vrot.lane.b32.xlu0 %v1258, 127
          %v1263 = vpop.permute.xlu0 %1262
          %1264 = vrot.lane.b32.xlu0 %v1259, 127
          %v1265 = vpop.permute.xlu0 %1264
          %v1268 = vadd.f32 %v1210, %v1263
          %v1269 = vadd.f32 %v1211, %v1265
          %v1270 = vstv %s1256
          %v1271 = vmul.f32 %v1270, %v1212
          %v1272 = vmul.f32 %v1270, %v1213
          %1275 = vrot.lane.b32.xlu0 %v1271, 127
          %v1276 = vpop.permute.xlu0 %1275
          %1277 = vrot.lane.b32.xlu0 %v1272, 127
          %v1278 = vpop.permute.xlu0 %1277
          %v1281 = vadd.f32 %v1225, %v1276
          %v1282 = vadd.f32 %v1226, %v1278
          %s1283 = sld [smem:[#allocation5 + $0x26]]
          %s1284 = sld [smem:[#allocation5 + $0x57]]
          %v1285 = vstv %s1283
          %v1286 = vmul.f32 %v1285, %v1197
          %v1287 = vmul.f32 %v1285, %v1198
          %1290 = vrot.lane.b32.xlu0 %v1286, 125
          %v1291 = vpop.permute.xlu0 %1290
          %1292 = vrot.lane.b32.xlu0 %v1287, 125
          %v1293 = vpop.permute.xlu0 %1292
          %v1296 = vadd.f32 %v1240, %v1291
          %v1297 = vadd.f32 %v1241, %v1293
          %v1298 = vstv %s1284
          %v1299 = vmul.f32 %v1298, %v1212
          %v1300 = vmul.f32 %v1298, %v1213
          %1303 = vrot.lane.b32.xlu0 %v1299, 125
          %v1304 = vpop.permute.xlu0 %1303
          %1305 = vrot.lane.b32.xlu0 %v1300, 125
          %v1306 = vpop.permute.xlu0 %1305
          %v1309 = vadd.f32 %v1253, %v1304
          %v1310 = vadd.f32 %v1254, %v1306
          %s1311 = sld [smem:[#allocation5 + $0x27]]
          %s1312 = sld [smem:[#allocation5 + $0x58]]
          %v1313 = vstv %s1311
          %v1314 = vmul.f32 %v1313, %v1197
          %v1315 = vmul.f32 %v1313, %v1198
          %1318 = vrot.lane.b32.xlu0 %v1314, 125
          %v1319 = vpop.permute.xlu0 %1318
          %1320 = vrot.lane.b32.xlu0 %v1315, 125
          %v1321 = vpop.permute.xlu0 %1320
          %v1324 = vadd.f32 %v1268, %v1319
          %v1325 = vadd.f32 %v1269, %v1321
          %v1326 = vstv %s1312
          %v1327 = vmul.f32 %v1326, %v1212
          %v1328 = vmul.f32 %v1326, %v1213
          %1331 = vrot.lane.b32.xlu0 %v1327, 125
          %v1332 = vpop.permute.xlu0 %1331
          %1333 = vrot.lane.b32.xlu0 %v1328, 125
          %v1334 = vpop.permute.xlu0 %1333
          %v1337 = vadd.f32 %v1281, %v1332
          %v1338 = vadd.f32 %v1282, %v1334
          %s1339 = sld [smem:[#allocation5 + $0x28]]
          %s1340 = sld [smem:[#allocation5 + $0x59]]
          %v1341 = vstv %s1339
          %v1342 = vmul.f32 %v1341, %v1197
          %v1343 = vmul.f32 %v1341, %v1198
          %1346 = vrot.lane.b32.xlu0 %v1342, 123
          %v1347 = vpop.permute.xlu0 %1346
          %1348 = vrot.lane.b32.xlu0 %v1343, 123
          %v1349 = vpop.permute.xlu0 %1348
          %v1352 = vadd.f32 %v1296, %v1347
          %v1353 = vadd.f32 %v1297, %v1349
          %v1354 = vstv %s1340
          %v1355 = vmul.f32 %v1354, %v1212
          %v1356 = vmul.f32 %v1354, %v1213
          %1359 = vrot.lane.b32.xlu0 %v1355, 123
          %v1360 = vpop.permute.xlu0 %1359
          %1361 = vrot.lane.b32.xlu0 %v1356, 123
          %v1362 = vpop.permute.xlu0 %1361
          %v1365 = vadd.f32 %v1309, %v1360
          %v1366 = vadd.f32 %v1310, %v1362
          %s1367 = sld [smem:[#allocation5 + $0x29]]
          %s1368 = sld [smem:[#allocation5 + $0x5a]]
          %v1369 = vstv %s1367
          %v1370 = vmul.f32 %v1369, %v1197
          %v1371 = vmul.f32 %v1369, %v1198
          %1374 = vrot.lane.b32.xlu0 %v1370, 123
          %v1375 = vpop.permute.xlu0 %1374
          %1376 = vrot.lane.b32.xlu0 %v1371, 123
          %v1377 = vpop.permute.xlu0 %1376
          %v1380 = vadd.f32 %v1324, %v1375
          %v1381 = vadd.f32 %v1325, %v1377
          %v1382 = vstv %s1368
          %v1383 = vmul.f32 %v1382, %v1212
          %v1384 = vmul.f32 %v1382, %v1213
          %1387 = vrot.lane.b32.xlu0 %v1383, 123
          %v1388 = vpop.permute.xlu0 %1387
          %1389 = vrot.lane.b32.xlu0 %v1384, 123
          %v1390 = vpop.permute.xlu0 %1389
          %v1393 = vadd.f32 %v1337, %v1388
          %v1394 = vadd.f32 %v1338, %v1390
          %s1395 = sld [smem:[#allocation5 + $0x2a]]
          %s1396 = sld [smem:[#allocation5 + $0x5b]]
          %v1397 = vld [vmem:[#allocation4 + $0x6] sm:$0xff]
          %v1398 = vld [vmem:[#allocation4 + $0xe] sm:$0xff]
          %v1399 = vstv %s1395
          %v1400 = vmul.f32 %v1399, %v1397
          %v1401 = vmul.f32 %v1399, %v1398
          %v1402 = vadd.f32 %v1352, %v1400
          %v1403 = vadd.f32 %v1353, %v1401
          %v1404 = vld [vmem:[%s288 + $0x6] sm:$0xff]
          %v1405 = vld [vmem:[%s288 + $0xe] sm:$0xff]
          %v1406 = vstv %s1396
          %v1407 = vmul.f32 %v1406, %v1404
          %v1408 = vmul.f32 %v1406, %v1405
          %v1409 = vadd.f32 %v1365, %v1407
          %v1410 = vadd.f32 %v1366, %v1408
          %s1411 = sld [smem:[#allocation5 + $0x2b]]
          %s1412 = sld [smem:[#allocation5 + $0x5c]]
          %v1413 = vstv %s1411
          %v1414 = vmul.f32 %v1413, %v1397
          %v1415 = vmul.f32 %v1413, %v1398
          %v1416 = vadd.f32 %v1380, %v1414
          %v1417 = vadd.f32 %v1381, %v1415
          %v1418 = vstv %s1412
          %v1419 = vmul.f32 %v1418, %v1404
          %v1420 = vmul.f32 %v1418, %v1405
          %v1421 = vadd.f32 %v1393, %v1419
          %v1422 = vadd.f32 %v1394, %v1420
          %s1423 = sld [smem:[#allocation5 + $0x2c]]
          %s1424 = sld [smem:[#allocation5 + $0x5d]]
          %v1425 = vstv %s1423
          %v1426 = vmul.f32 %v1425, %v1397
          %v1427 = vmul.f32 %v1425, %v1398
          %1430 = vrot.lane.b32.xlu0 %v1426, 126
          %v1431 = vpop.permute.xlu0 %1430
          %1432 = vrot.lane.b32.xlu0 %v1427, 126
          %v1433 = vpop.permute.xlu0 %1432
          %v1436 = vadd.f32 %v1402, %v1431
          %v1437 = vadd.f32 %v1403, %v1433
          %v1438 = vstv %s1424
          %v1439 = vmul.f32 %v1438, %v1404
          %v1440 = vmul.f32 %v1438, %v1405
          %1443 = vrot.lane.b32.xlu0 %v1439, 126
          %v1444 = vpop.permute.xlu0 %1443
          %1445 = vrot.lane.b32.xlu0 %v1440, 126
          %v1446 = vpop.permute.xlu0 %1445
          %v1449 = vadd.f32 %v1409, %v1444
          %v1450 = vadd.f32 %v1410, %v1446
          %s1451 = sld [smem:[#allocation5 + $0x2d]]
          %s1452 = sld [smem:[#allocation5 + $0x5e]]
          %v1453 = vstv %s1451
          %v1454 = vmul.f32 %v1453, %v1397
          %v1455 = vmul.f32 %v1453, %v1398
          %1458 = vrot.lane.b32.xlu0 %v1454, 126
          %v1459 = vpop.permute.xlu0 %1458
          %1460 = vrot.lane.b32.xlu0 %v1455, 126
          %v1461 = vpop.permute.xlu0 %1460
          %v1464 = vadd.f32 %v1416, %v1459
          %v1465 = vadd.f32 %v1417, %v1461
          %v1466 = vstv %s1452
          %v1467 = vmul.f32 %v1466, %v1404
          %v1468 = vmul.f32 %v1466, %v1405
          %1471 = vrot.lane.b32.xlu0 %v1467, 126
          %v1472 = vpop.permute.xlu0 %1471
          %1473 = vrot.lane.b32.xlu0 %v1468, 126
          %v1474 = vpop.permute.xlu0 %1473
          %v1477 = vadd.f32 %v1421, %v1472
          %v1478 = vadd.f32 %v1422, %v1474
          %s1479 = sld [smem:[#allocation5 + $0x2e]]
          %s1480 = sld [smem:[#allocation5 + $0x5f]]
          %v1481 = vstv %s1479
          %v1482 = vmul.f32 %v1481, %v1397
          %v1483 = vmul.f32 %v1481, %v1398
          %1486 = vrot.lane.b32.xlu0 %v1482, 124
          %v1487 = vpop.permute.xlu0 %1486
          %1488 = vrot.lane.b32.xlu0 %v1483, 124
          %v1489 = vpop.permute.xlu0 %1488
          %v1492 = vadd.f32 %v1436, %v1487
          %v1493 = vadd.f32 %v1437, %v1489
          %v1494 = vstv %s1480
          %v1495 = vmul.f32 %v1494, %v1404
          %v1496 = vmul.f32 %v1494, %v1405
          %1499 = vrot.lane.b32.xlu0 %v1495, 124
          %v1500 = vpop.permute.xlu0 %1499
          %1501 = vrot.lane.b32.xlu0 %v1496, 124
          %v1502 = vpop.permute.xlu0 %1501
          %v1505 = vadd.f32 %v1449, %v1500
          %v1506 = vadd.f32 %v1450, %v1502
          %s1507 = sld [smem:[#allocation5 + $0x2f]]
          %s1508 = sld [smem:[#allocation5 + $0x60]]
          %v1509 = vstv %s1507
          %v1510 = vmul.f32 %v1509, %v1397
          %v1511 = vmul.f32 %v1509, %v1398
          %1514 = vrot.lane.b32.xlu0 %v1510, 124
          %v1515 = vpop.permute.xlu0 %1514
          %1516 = vrot.lane.b32.xlu0 %v1511, 124
          %v1517 = vpop.permute.xlu0 %1516
          %v1520 = vadd.f32 %v1464, %v1515
          %v1521 = vadd.f32 %v1465, %v1517
          %v1522 = vstv %s1508
          %v1523 = vmul.f32 %v1522, %v1404
          %v1524 = vmul.f32 %v1522, %v1405
          %1527 = vrot.lane.b32.xlu0 %v1523, 124
          %v1528 = vpop.permute.xlu0 %1527
          %1529 = vrot.lane.b32.xlu0 %v1524, 124
          %v1530 = vpop.permute.xlu0 %1529
          %v1533 = vadd.f32 %v1477, %v1528
          %v1534 = vadd.f32 %v1478, %v1530
          %s1535 = sld [smem:[#allocation5 + $0x30]]
          %s1536 = sld [smem:[#allocation5 + $0x61]]
          %v1537 = vstv %s1535
          %v1538 = vmul.f32 %v1537, %v1397
          %v1539 = vmul.f32 %v1537, %v1398
          %1542 = vrot.lane.b32.xlu0 %v1538, 122
          %v1543 = vpop.permute.xlu0 %1542
          %1544 = vrot.lane.b32.xlu0 %v1539, 122
          %v1545 = vpop.permute.xlu0 %1544
          %v1548 = vadd.f32 %v1492, %v1543
          %v1549 = vadd.f32 %v1493, %v1545
          %v1550 = vstv %s1536
          %v1551 = vmul.f32 %v1550, %v1404
          %v1552 = vmul.f32 %v1550, %v1405
          %1555 = vrot.lane.b32.xlu0 %v1551, 122
          %v1556 = vpop.permute.xlu0 %1555
          %1557 = vrot.lane.b32.xlu0 %v1552, 122
          %v1558 = vpop.permute.xlu0 %1557
          %v1561 = vadd.f32 %v1505, %v1556
          %v1562 = vadd.f32 %v1506, %v1558
          %1565 = vrot.lane.b32.xlu0 %v1520, 127
          %v1566 = vpop.permute.xlu0 %1565
          %1567 = vrot.lane.b32.xlu0 %v1521, 127
          %v1568 = vpop.permute.xlu0 %1567
          %v1571 = vadd.f32 %v1548, %v1566
          %v1572 = vadd.f32 %v1549, %v1568
          %1575 = vrot.lane.b32.xlu0 %v1533, 127
          %v1576 = vpop.permute.xlu0 %1575
          %1577 = vrot.lane.b32.xlu0 %v1534, 127
          %v1578 = vpop.permute.xlu0 %1577
          %v1581 = vadd.f32 %v1561, %v1576
          %v1582 = vadd.f32 %v1562, %v1578
          %v1583 = vadd.f32 %v1571, %v1581
          %v1584 = vadd.f32 %v1572, %v1582
          %v1585 = vxor.u32 %v1583, 2147483648
          %v1586 = vxor.u32 %v1584, 2147483648
          %v1587 = vmul.f32 %v1585, 1.442695
          %v1588 = vpow.pop %v1587
          %v1589 = vmul.f32 %v1586, 1.442695
          %v1590 = vpow.pop %v1589
          %v1591 = vadd.f32 %v1588, 1.0
          %v1592 = vadd.f32 %v1590, 1.0
          %v1593 = vrcp.pop %v1591
          %v1594 = vmul.f32 %v1591, %v1593
          %v1595 = vsub.f32 1.0, %v1594
          %v1596 = vmul.f32 %v1593, %v1595
          %v1597 = vadd.f32 %v1593, %v1596
          %vm1598 = vweird.f32 %v1591
          %vm1599 = vweird.f32 %v1593
          %vm1600 = vmor %vm1598, %vm1599
          %v1601 = vsel %vm1600, %v1593, %v1597
          %v1602 = vand.u32 2147483647, %v1591
          %vm1603 = vcmp.eq.f32.partialorder %v1602, 8.507059e+37
          %v1604 = vand.u32 %v1591, 2147483648
          %v1605 = vor.u32 1.1754944e-38, %v1604
          %v1606 = vsel %vm1603, %v1605, %v1601
          %v1607 = vmul.f32 1.0, %v1606
          %v1608 = vrcp.pop %v1592
          %v1609 = vmul.f32 %v1592, %v1608
          %v1610 = vsub.f32 1.0, %v1609
          %v1611 = vmul.f32 %v1608, %v1610
          %v1612 = vadd.f32 %v1608, %v1611
          %vm1613 = vweird.f32 %v1592
          %vm1614 = vweird.f32 %v1608
          %vm1615 = vmor %vm1613, %vm1614
          %v1616 = vsel %vm1615, %v1608, %v1612
          %v1617 = vand.u32 2147483647, %v1592
          %vm1618 = vcmp.eq.f32.partialorder %v1617, 8.507059e+37
          %v1619 = vand.u32 %v1592, 2147483648
          %v1620 = vor.u32 1.1754944e-38, %v1619
          %v1621 = vsel %vm1618, %v1620, %v1616
          %v1622 = vmul.f32 1.0, %v1621
          %1623 = vst.msk [vmem:[%s194] sm:$0xff] %vm215, %v1607
          %1624 = vst.msk [vmem:[%s194 + $0x8] sm:$0xff] %vm215, %v1622
        $region44: #{tpu_custom_call.1} parent=27 // pred_fallthru
          _
        %s1625 = sand.u32 %s89, 1
        %s1626 = scalar_lea.sflag [#allocation7], %s1625
        %s1627 = sand.u32 %s89, 1
        %s1628 = smul.addr %s1627, 16
        %s1629 = scalar_lea.vmem [#allocation10], %s1628
        // Predicated region
        $region45: #{tpu_custom_call.1} parent=27 // pred_check
          %p1630 = pneg %p99
        $region46: #{tpu_custom_call.1} parent=27 // pred_check_branch
          %1632 = sbr.rel (%p1630) target = $region48
        $region47: #{tpu_custom_call.1} parent=27 // pred_region
          %1634 = vsyncadd %s1626, 0
          %s1635 = smul.addr %s24, 2
          %s1636 = smul.addr %s1635, 8
          %s1637 = scalar_lea.hbm %s2, %s1636
          %s1638 = sshll.u32 %s1629, 4
          %s1639 = int_to_ptr.vmem [resolvable:$true] %s1638
          %s1640 = sshll.u32 %s1637, 4
          %s1641 = int_to_ptr.hbm [resolvable:$true] %s1640
          %1646 = dma.vmem_to_hbm [thread:$0]  %s1639, 256, %s1641, %s1626, 128, 128, 8
        $region48: #{tpu_custom_call.1} parent=27 // pred_fallthru
          _
      $region28: #{tpu_custom_call.1} parent=5 // pred_fallthru
        _
      %p1647 = scmp.le.s32.totalorder 2, %s15
      // Predicated region
      $region49: #{tpu_custom_call.1} parent=5 // pred_check
        %p1648 = pneg %p1647
      $region50: #{tpu_custom_call.1} parent=5 // pred_check_branch
        %1650 = sbr.rel (%p1648) target = $region52
      $region51: #{tpu_custom_call.1} parent=5 // pred_region
        %s1651 = ssub.s32 %s15, 2
        // Predicated region
        $region53: #{tpu_custom_call.1} parent=51 // pred_check
          %p1652 = pneg %p105
        $region54: #{tpu_custom_call.1} parent=51 // pred_check_branch
          %1654 = sbr.rel (%p1652) target = $region56
        $region55: #{tpu_custom_call.1} parent=51 // pred_region
          %s1655 = sand.u32 %s90, 1
          %s1656 = scalar_lea.sflag [#allocation7], %s1655
          %s1657 = sand.u32 %s90, 1
          %s1658 = smul.addr %s1657, 16
          %s1659 = scalar_lea.vmem [#allocation10], %s1658
          %1661 = dma.done %s1656, 256
        $region56: #{tpu_custom_call.1} parent=51 // pred_fallthru
          _
      $region52: #{tpu_custom_call.1} parent=5 // pred_fallthru
        _
    $region6: #{tpu_custom_call.1} parent=1 // loop_footer
      %s19 = sadd.s32 1, %s15
    $region7: #{tpu_custom_call.1} parent=1 // loop_footer_branch
      %14 = sbr.rel target = $region3
    $region8: #{tpu_custom_call.1} parent=1 // loop_exit
      _
    %1662 = vsyncpa [#allocation6], 1
    %s1663 = scalar_lea.sflag [#allocation6], 1
    %1664 = vsyncpa %s1663, 1
    %1665 = vsyncpa [#allocation7], 1
    %s1666 = scalar_lea.sflag [#allocation7], 1
    %1667 = vsyncpa %s1666, 1
    %1668 = vsyncpa [#allocation8], 1
    %s1669 = scalar_lea.sflag [#allocation8], 1
    %1670 = vsyncpa %s1669, 1

</llo_original>
